<compile_context>
chip_gen: v5e
topology: v5e:2x2
jax: 0.10.0
libtpu: 0.0.40
codegen_flags: <defaults>
</compile_context>

<pallas_src>
import functools
import math

import jax
import jax.numpy as jnp
from jax.experimental import pallas as pl
from jax.experimental.pallas import tpu as pltpu

EPS = 1e-5
HIDDEN = 512
LANE = 128


def _bn_relu(h, g, be):
    """Training-mode BatchNorm1d + ReLU as a fused single-pass scale/shift.

    Single-pass variance (E[h^2]-E[h]^2) is fine at these magnitudes / batch
    sizes in f32; switch to two-pass if activations ever get large.
    """
    inv_b = 1.0 / h.shape[0]
    mean = jnp.sum(h, axis=0, keepdims=True) * inv_b
    mean_sq = jnp.sum(h * h, axis=0, keepdims=True) * inv_b
    var = mean_sq - mean * mean                    # biased batch variance
    scale = g * jax.lax.rsqrt(var + EPS)           # rsqrt -> EUP slot
    shift = be - mean * scale
    return jnp.maximum(h * scale + shift, 0.0)


def _generator_kernel(x_ref, w1_ref, w2_ref, w3_ref, bn_ref, out_ref):
    f32, bf16 = jnp.float32, jnp.bfloat16
    out_pad = out_ref.shape[-1]

    # Packed per-feature params: rows = [g1, be1, g2, be2, b3]; static slices.
    g1 = bn_ref[0:1, 0:HIDDEN]
    be1 = bn_ref[1:2, 0:HIDDEN]
    g2 = bn_ref[2:3, 0:HIDDEN]
    be2 = bn_ref[3:4, 0:HIDDEN]
    b3 = bn_ref[4:5, 0:out_pad]

    # Layer 1: one MXU push over the pre-concatenated (B, in_dim) bf16 input.
    # b1 dropped (cancelled by BN mean subtraction).  bf16 x bf16, f32 acc.
    h = jnp.dot(x_ref[...], w1_ref[...], preferred_element_type=f32)
    h = _bn_relu(h, g1, be1)

    # Layer 2 (b2 dropped likewise).
    h = jnp.dot(h.astype(bf16), w2_ref[...], preferred_element_type=f32)
    h = _bn_relu(h, g2, be2)

    # Output layer: lane-padded N -> dense, unmasked stores.
    out = jnp.dot(h.astype(bf16), w3_ref[...], preferred_element_type=f32) + b3
    out_ref[...] = out.astype(out_ref.dtype)


def init_generator_params(key, latent_dim, cond_dim, output_shape):
    """Deterministic synthetic parameters with the module's shapes.

    Linear weights are pre-rounded through bf16 so the kernel (bf16 storage)
    and the f32 reference operate on identical weight values.
    """
    input_dim = latent_dim + cond_dim
    out_dim = math.prod(output_shape)
    keys = jax.random.split(key, 6)

    def lin(k, fan_in, fan_out):
        bound = 1.0 / math.sqrt(fan_in)
        kw, kb = jax.random.split(k)
        w = jax.random.uniform(kw, (fan_in, fan_out), jnp.float32, -bound, bound)
        w = w.astype(jnp.bfloat16).astype(jnp.float32)
        b = jax.random.uniform(kb, (1, fan_out), jnp.float32, -bound, bound)
        return w, b

    w1, b1 = lin(keys[0], input_dim, HIDDEN)
    w2, b2 = lin(keys[1], HIDDEN, HIDDEN)
    w3, b3 = lin(keys[2], HIDDEN, out_dim)

    g1 = 1.0 + 0.01 * jax.random.normal(keys[3], (1, HIDDEN), jnp.float32)
    be1 = 0.01 * jax.random.normal(keys[4], (1, HIDDEN), jnp.float32)
    g2 = 1.0 + 0.01 * jax.random.normal(keys[5], (1, HIDDEN), jnp.float32)
    be2 = jnp.zeros((1, HIDDEN), jnp.float32)

    return dict(w1=w1, b1=b1, g1=g1, be1=be1,
                w2=w2, b2=b2, g2=g2, be2=be2,
                w3=w3, b3=b3)


def pack_generator_params(params):
    """Kernel-ready params: bf16 weights (no in-kernel upcast), b1/b2 dropped,
    output layer lane-padded to a multiple of 128, and all per-feature vectors
    packed into ONE (5, C) f32 operand: rows [g1, be1, g2, be2, b3_padded]."""
    out_dim = params["w3"].shape[1]
    out_pad = ((out_dim + LANE - 1) // LANE) * LANE
    c = max(HIDDEN, out_pad)

    w3 = jnp.pad(params["w3"], ((0, 0), (0, out_pad - out_dim)))
    b3 = jnp.pad(params["b3"], ((0, 0), (0, out_pad - out_dim)))

    def row(v):
        return jnp.pad(v.astype(jnp.float32), ((0, 0), (0, c - v.shape[1])))

    bn_pack = jnp.concatenate(
        [row(params["g1"]), row(params["be1"]),
         row(params["g2"]), row(params["be2"]), row(b3)], axis=0)   # (5, c)

    return dict(
        w1=params["w1"].astype(jnp.bfloat16),
        w2=params["w2"].astype(jnp.bfloat16),
        w3=w3.astype(jnp.bfloat16),
        bn_pack=bn_pack,
    )


@functools.partial(jax.jit, static_argnames=("output_shape", "call_batch"))
def generator_forward(noise, condition, kernel_params, output_shape,
                      call_batch=None):
    """Fused Generator forward.

    Rows of `noise`/`condition` are grouped into independent generator calls
    of `call_batch` rows each (BatchNorm statistics are per call).  Default:
    the whole input is one call, matching the PyTorch module exactly.
    """
    B = noise.shape[0]
    if call_batch is None:
        call_batch = B
    assert B % call_batch == 0
    num_calls = B // call_batch

    out_dim = math.prod(output_shape)
    w1 = kernel_params["w1"]
    w2 = kernel_params["w2"]
    w3 = kernel_params["w3"]
    bn_pack = kernel_params["bn_pack"]
    in_dim = w1.shape[0]
    out_pad = w3.shape[1]

    # Single small activation operand; bf16 so no promotion occurs in-kernel.
    x = jnp.concatenate([noise, condition], axis=1).astype(jnp.bfloat16)
    assert x.shape == (B, in_dim)

    flat_inputs = (x, w1, w2, w3, bn_pack)
    flops = 2 * B * (in_dim * HIDDEN + HIDDEN * HIDDEN + HIDDEN * out_pad)
    bytes_accessed = (sum(int(math.prod(a.shape)) * a.dtype.itemsize
                          for a in flat_inputs) + B * out_pad * 4)
    cost = pl.CostEstimate(flops=flops,
                           transcendentals=2 * HIDDEN * num_calls,
                           bytes_accessed=bytes_accessed)

    out = pl.pallas_call(
        _generator_kernel,
        out_shape=jax.ShapeDtypeStruct((B, out_pad), jnp.float32),
        grid=(num_calls,),
        in_specs=[
            # Per-call activation block streams across the grid.
            pl.BlockSpec((call_batch, in_dim), lambda c: (c, 0)),
            # Weights & packed BN params: constant index_map -> stay
            # VMEM-resident across grid steps (no per-call weight HBM traffic).
            pl.BlockSpec((in_dim, HIDDEN), lambda c: (0, 0)),
            pl.BlockSpec((HIDDEN, HIDDEN), lambda c: (0, 0)),
            pl.BlockSpec((HIDDEN, out_pad), lambda c: (0, 0)),
            pl.BlockSpec(bn_pack.shape, lambda c: (0, 0)),
        ],
        out_specs=pl.BlockSpec((call_batch, out_pad), lambda c: (c, 0)),
        compiler_params=pltpu.CompilerParams(
            dimension_semantics=("parallel",)),
        cost_estimate=cost,
    )(*flat_inputs)

    return out[:, :out_dim].reshape((B,) + tuple(output_shape))


def _reference_forward(noise, condition, params, output_shape):
    """Pure-JAX f32 reference with full PyTorch training-mode semantics
    (including b1/b2 and two-pass variance)."""
    x = jnp.concatenate([noise, condition], axis=1).astype(jnp.float32)

    def bn_relu(h, g, be):
        m = h.mean(0, keepdims=True)
        v = ((h - m) ** 2).mean(0, keepdims=True)
        return jnp.maximum((h - m) / jnp.sqrt(v + EPS) * g + be, 0.0)

    h = x @ params["w1"] + params["b1"]
    h = bn_relu(h, params["g1"], params["be1"])
    h = h @ params["w2"] + params["b2"]
    h = bn_relu(h, params["g2"], params["be2"])
    out = h @ params["w3"] + params["b3"]
    return out.reshape((x.shape[0],) + tuple(output_shape))


if __name__ == "__main__":
    latent_dim = 16
    cond_dim = 8
    output_shape = (4, 8)     # prod = 32
    batch = 8                 # one generator call

    key = jax.random.PRNGKey(0)
    k_params, k_noise, k_cond, k_noise_m, k_cond_m = jax.random.split(key, 5)

    params = init_generator_params(k_params, latent_dim, cond_dim, output_shape)
    kernel_params = pack_generator_params(params)

    # bf16 weights + bf16 activation feeds to the MXU drift slightly vs the
    # f32 PyTorch-semantics reference; tolerance per review guidance.
    tol = dict(atol=1e-1, rtol=1e-1)

    # --- single call (grid of 1): exact module semantics -------------------
    noise = jax.random.normal(k_noise, (batch, latent_dim), jnp.float32)
    condition = jax.random.normal(k_cond, (batch, cond_dim), jnp.float32)
    out = jax.block_until_ready(
        generator_forward(noise, condition, kernel_params, output_shape))
    ref = _reference_forward(noise, condition, params, output_shape)
    assert out.shape == (batch,) + output_shape, out.shape
    assert jnp.allclose(out, ref, **tol), "single-call mismatch vs reference"

    # --- several independent calls fused into one pallas_call --------------
    # (weights stay VMEM-resident across the grid; BN stats are per call)
    num_calls = 4
    noise_m = jax.random.normal(k_noise_m, (num_calls * batch, latent_dim),
                                jnp.float32)
    cond_m = jax.random.normal(k_cond_m, (num_calls * batch, cond_dim),
                               jnp.float32)
    out_m = jax.block_until_ready(
        generator_forward(noise_m, cond_m, kernel_params, output_shape,
                          call_batch=batch))
    ref_m = jnp.concatenate(
        [_reference_forward(noise_m[c * batch:(c + 1) * batch],
                            cond_m[c * batch:(c + 1) * batch],
                            params, output_shape)
         for c in range(num_calls)], axis=0)
    assert out_m.shape == (num_calls * batch,) + output_shape, out_m.shape
    assert jnp.allclose(out_m, ref_m, **tol), "multi-call mismatch vs reference"

    print("KERNEL_OK")
</pallas_src>

<mosaic_0001>
module attributes {stable_mosaic.version = 11 : i64} {
  func.func @_generator_kernel(%arg0: i32, %arg1: memref<8x24xbf16, #tpu.memory_space<vmem>>, %arg2: memref<24x512xbf16, #tpu.memory_space<vmem>>, %arg3: memref<512x512xbf16, #tpu.memory_space<vmem>>, %arg4: memref<512x128xbf16, #tpu.memory_space<vmem>>, %arg5: memref<5x512xf32, #tpu.memory_space<vmem>>, %arg6: memref<8x128xf32, #tpu.memory_space<vmem>>) attributes {dimension_semantics = [#tpu.dimension_semantics<parallel>], iteration_bounds = array<i64: 1>, scalar_prefetch = 0 : i64, scratch_operands = 0 : i64, tpu.core_type = #tpu.core_type<tc>, window_params = [{transform_indices = @transform_0, window_bounds = array<i64: 8, 24>}, {pipeline_mode = #tpu.pipeline_mode<synchronous>, transform_indices = @transform_1, window_bounds = array<i64: 24, 512>}, {pipeline_mode = #tpu.pipeline_mode<synchronous>, transform_indices = @transform_2, window_bounds = array<i64: 512, 512>}, {pipeline_mode = #tpu.pipeline_mode<synchronous>, transform_indices = @transform_3, window_bounds = array<i64: 512, 128>}, {pipeline_mode = #tpu.pipeline_mode<synchronous>, transform_indices = @transform_4, window_bounds = array<i64: 5, 512>}, {transform_indices = @transform_5, window_bounds = array<i64: 8, 128>}]} {
    %c0 = arith.constant 0 : index
    %c0_0 = arith.constant 0 : index
    %0 = vector.load %arg5[%c0, %c0_0] : memref<5x512xf32, #tpu.memory_space<vmem>>, vector<1x512xf32>
    %c1 = arith.constant 1 : index
    %c0_1 = arith.constant 0 : index
    %1 = vector.load %arg5[%c1, %c0_1] : memref<5x512xf32, #tpu.memory_space<vmem>>, vector<1x512xf32>
    %c2 = arith.constant 2 : index
    %c0_2 = arith.constant 0 : index
    %2 = vector.load %arg5[%c2, %c0_2] : memref<5x512xf32, #tpu.memory_space<vmem>>, vector<1x512xf32>
    %c3 = arith.constant 3 : index
    %c0_3 = arith.constant 0 : index
    %3 = vector.load %arg5[%c3, %c0_3] : memref<5x512xf32, #tpu.memory_space<vmem>>, vector<1x512xf32>
    %c4 = arith.constant 4 : index
    %c0_4 = arith.constant 0 : index
    %4 = vector.load %arg5[%c4, %c0_4] : memref<5x512xf32, #tpu.memory_space<vmem>>, vector<1x128xf32>
    %c0_5 = arith.constant 0 : index
    %c0_6 = arith.constant 0 : index
    %5 = vector.load %arg1[%c0_5, %c0_6] : memref<8x24xbf16, #tpu.memory_space<vmem>>, vector<8x24xbf16>
    %c0_7 = arith.constant 0 : index
    %c0_8 = arith.constant 0 : index
    %6 = vector.load %arg2[%c0_7, %c0_8] : memref<24x512xbf16, #tpu.memory_space<vmem>>, vector<24x512xbf16>
    %cst = arith.constant dense<0.000000e+00> : vector<8x512xf32>
    %7 = tpu.matmul %5, %6, %cst {dimension_numbers = #tpu.dot_dimension_numbers<[1], [0], [0], [1], [0, 0, 1, 1], [], []>} : vector<8x24xbf16>, vector<24x512xbf16>, vector<8x512xf32> -> vector<8x512xf32>
    %cst_9 = arith.constant dense<0.000000e+00> : vector<512xf32>
    %8 = vector.multi_reduction <add>, %7, %cst_9 [0] : vector<8x512xf32> to vector<512xf32>
    %9 = vector.shape_cast %8 : vector<512xf32> to vector<1x512xf32>
    %cst_10 = arith.constant 1.250000e-01 : f32
    %10 = vector.broadcast %cst_10 : f32 to vector<1x512xf32>
    %11 = arith.mulf %9, %10 : vector<1x512xf32>
    %12 = arith.mulf %7, %7 : vector<8x512xf32>
    %cst_11 = arith.constant dense<0.000000e+00> : vector<512xf32>
    %13 = vector.multi_reduction <add>, %12, %cst_11 [0] : vector<8x512xf32> to vector<512xf32>
    %14 = vector.shape_cast %13 : vector<512xf32> to vector<1x512xf32>
    %cst_12 = arith.constant 1.250000e-01 : f32
    %15 = vector.broadcast %cst_12 : f32 to vector<1x512xf32>
    %16 = arith.mulf %14, %15 : vector<1x512xf32>
    %17 = arith.mulf %11, %11 : vector<1x512xf32>
    %18 = arith.subf %16, %17 : vector<1x512xf32>
    %cst_13 = arith.constant 9.99999974E-6 : f32
    %19 = vector.broadcast %cst_13 : f32 to vector<1x512xf32>
    %20 = arith.addf %18, %19 : vector<1x512xf32>
    %21 = math.rsqrt %20 : vector<1x512xf32>
    %22 = arith.mulf %0, %21 : vector<1x512xf32>
    %23 = arith.mulf %11, %22 : vector<1x512xf32>
    %24 = arith.subf %1, %23 : vector<1x512xf32>
    %25 = vector.broadcast %22 : vector<1x512xf32> to vector<8x512xf32>
    %26 = arith.mulf %7, %25 : vector<8x512xf32>
    %27 = vector.broadcast %24 : vector<1x512xf32> to vector<8x512xf32>
    %28 = arith.addf %26, %27 : vector<8x512xf32>
    %cst_14 = arith.constant 0.000000e+00 : f32
    %29 = vector.broadcast %cst_14 : f32 to vector<8x512xf32>
    %30 = arith.maximumf %28, %29 : vector<8x512xf32>
    %31 = arith.truncf %30 : vector<8x512xf32> to vector<8x512xbf16>
    %c0_15 = arith.constant 0 : index
    %c0_16 = arith.constant 0 : index
    %32 = vector.load %arg3[%c0_15, %c0_16] : memref<512x512xbf16, #tpu.memory_space<vmem>>, vector<512x512xbf16>
    %cst_17 = arith.constant dense<0.000000e+00> : vector<8x512xf32>
    %33 = tpu.matmul %31, %32, %cst_17 {dimension_numbers = #tpu.dot_dimension_numbers<[1], [0], [0], [1], [0, 0, 1, 1], [], []>} : vector<8x512xbf16>, vector<512x512xbf16>, vector<8x512xf32> -> vector<8x512xf32>
    %cst_18 = arith.constant dense<0.000000e+00> : vector<512xf32>
    %34 = vector.multi_reduction <add>, %33, %cst_18 [0] : vector<8x512xf32> to vector<512xf32>
    %35 = vector.shape_cast %34 : vector<512xf32> to vector<1x512xf32>
    %cst_19 = arith.constant 1.250000e-01 : f32
    %36 = vector.broadcast %cst_19 : f32 to vector<1x512xf32>
    %37 = arith.mulf %35, %36 : vector<1x512xf32>
    %38 = arith.mulf %33, %33 : vector<8x512xf32>
    %cst_20 = arith.constant dense<0.000000e+00> : vector<512xf32>
    %39 = vector.multi_reduction <add>, %38, %cst_20 [0] : vector<8x512xf32> to vector<512xf32>
    %40 = vector.shape_cast %39 : vector<512xf32> to vector<1x512xf32>
    %cst_21 = arith.constant 1.250000e-01 : f32
    %41 = vector.broadcast %cst_21 : f32 to vector<1x512xf32>
    %42 = arith.mulf %40, %41 : vector<1x512xf32>
    %43 = arith.mulf %37, %37 : vector<1x512xf32>
    %44 = arith.subf %42, %43 : vector<1x512xf32>
    %cst_22 = arith.constant 9.99999974E-6 : f32
    %45 = vector.broadcast %cst_22 : f32 to vector<1x512xf32>
    %46 = arith.addf %44, %45 : vector<1x512xf32>
    %47 = math.rsqrt %46 : vector<1x512xf32>
    %48 = arith.mulf %2, %47 : vector<1x512xf32>
    %49 = arith.mulf %37, %48 : vector<1x512xf32>
    %50 = arith.subf %3, %49 : vector<1x512xf32>
    %51 = vector.broadcast %48 : vector<1x512xf32> to vector<8x512xf32>
    %52 = arith.mulf %33, %51 : vector<8x512xf32>
    %53 = vector.broadcast %50 : vector<1x512xf32> to vector<8x512xf32>
    %54 = arith.addf %52, %53 : vector<8x512xf32>
    %cst_23 = arith.constant 0.000000e+00 : f32
    %55 = vector.broadcast %cst_23 : f32 to vector<8x512xf32>
    %56 = arith.maximumf %54, %55 : vector<8x512xf32>
    %57 = arith.truncf %56 : vector<8x512xf32> to vector<8x512xbf16>
    %c0_24 = arith.constant 0 : index
    %c0_25 = arith.constant 0 : index
    %58 = vector.load %arg4[%c0_24, %c0_25] : memref<512x128xbf16, #tpu.memory_space<vmem>>, vector<512x128xbf16>
    %cst_26 = arith.constant dense<0.000000e+00> : vector<8x128xf32>
    %59 = tpu.matmul %57, %58, %cst_26 {dimension_numbers = #tpu.dot_dimension_numbers<[1], [0], [0], [1], [0, 0, 1, 1], [], []>} : vector<8x512xbf16>, vector<512x128xbf16>, vector<8x128xf32> -> vector<8x128xf32>
    %60 = vector.broadcast %4 : vector<1x128xf32> to vector<8x128xf32>
    %61 = arith.addf %59, %60 : vector<8x128xf32>
    %c0_27 = arith.constant 0 : index
    %c0_28 = arith.constant 0 : index
    %62 = vector.load %arg6[%c0_27, %c0_28] : memref<8x128xf32, #tpu.memory_space<vmem>>, vector<8x128xf32>
    tpu.vector_store %arg6[%c0_27, %c0_28], %61 {strides = array<i32>} : memref<8x128xf32, #tpu.memory_space<vmem>>, vector<8x128xf32>,
    return
  }
  func.func @transform_0(%arg0: i32) -> (i32, i32) {
    %c0_i32 = arith.constant 0 : i32
    %c0_i32_0 = arith.constant 0 : i32
    return %arg0, %c0_i32 : i32, i32
  }
  func.func @transform_1(%arg0: i32) -> (i32, i32) {
    %c0_i32 = arith.constant 0 : i32
    %c0_i32_0 = arith.constant 0 : i32
    %c0_i32_1 = arith.constant 0 : i32
    return %c0_i32, %c0_i32_0 : i32, i32
  }
  func.func @transform_2(%arg0: i32) -> (i32, i32) {
    %c0_i32 = arith.constant 0 : i32
    %c0_i32_0 = arith.constant 0 : i32
    %c0_i32_1 = arith.constant 0 : i32
    return %c0_i32, %c0_i32_0 : i32, i32
  }
  func.func @transform_3(%arg0: i32) -> (i32, i32) {
    %c0_i32 = arith.constant 0 : i32
    %c0_i32_0 = arith.constant 0 : i32
    %c0_i32_1 = arith.constant 0 : i32
    return %c0_i32, %c0_i32_0 : i32, i32
  }
  func.func @transform_4(%arg0: i32) -> (i32, i32) {
    %c0_i32 = arith.constant 0 : i32
    %c0_i32_0 = arith.constant 0 : i32
    %c0_i32_1 = arith.constant 0 : i32
    return %c0_i32, %c0_i32_0 : i32, i32
  }
  func.func @transform_5(%arg0: i32) -> (i32, i32) {
    %c0_i32 = arith.constant 0 : i32
    %c0_i32_0 = arith.constant 0 : i32
    return %arg0, %c0_i32 : i32, i32
  }
}

</mosaic_0001>

<llo_original>
// kernel: generator_forward.1
$region0: #{generator_forward.1}
  #allocation0 [shape = 'u32[]', space=smem, size = 0x4, offset = 0x4, fixed_abs, tag = 'smem constant byte address 0x4 - core index']
  #allocation1 [shape = 'u32[72,128]{1,0:T(1,128)}', space=vmem, size = 0x9000, scoped, tag = 'internal scratch']
  %s0 = inlined_call_operand.vmem [shape: bf16[8,24], index: 0, kind: input, shape index: {}]
  %s1 = inlined_call_operand.hbm [shape: bf16[24,512], index: 1, kind: input, shape index: {}]
  %s2 = inlined_call_operand.hbm [shape: bf16[512,512], index: 2, kind: input, shape index: {}]
  %s3 = inlined_call_operand.hbm [shape: bf16[512,128], index: 3, kind: input, shape index: {}]
  %s4 = inlined_call_operand.vmem [shape: f32[5,512], index: 4, kind: input, shape index: {}]
  %s5 = inlined_call_operand.vmem [shape: f32[8,128], index: 5, kind: output, shape index: {}]
  %s6 = sld [smem:[#allocation0]]
  $region42: #{generator_forward.1} parent=0
    _
  %s8 = ssub.s32 1, %s6
  %s9 = scalar_select 0, %s8, %s6
  $region1: #{generator_forward.1} parent=0
    #allocation2 [shape = 'u8[24576]{0}', space=vmem, size = 0x6000, scoped, tag = 'input window, operand 1, single buffered']
    #allocation3 [shape = 's32[1]{0}', space=sflag, size = 0x4, scoped, tag = 'scoped memory for generator_forward.1']
    #allocation4 [shape = 'u8[524288]{0}', space=vmem, size = 0x80000, scoped, tag = 'input window, operand 2, single buffered']
    #allocation5 [shape = 's32[1]{0}', space=sflag, size = 0x4, scoped, tag = 'scoped memory for generator_forward.1']
    #allocation6 [shape = 'u8[131072]{0}', space=vmem, size = 0x20000, scoped, tag = 'input window, operand 3, single buffered']
    %10 = vsyncpa [#allocation3], 0
    %11 = vsyncpa [#allocation5], 0
    // Predicated region
    $region2: #{generator_forward.1} parent=1 // pred_check
      _
    $region3: #{generator_forward.1} parent=1 // pred_check_branch
      %13 = sbr.rel (0) target = $region5
    $region4: #{generator_forward.1} parent=1 // pred_region
      _
    $region5: #{generator_forward.1} parent=1 // pred_fallthru
      _
    // Predicated region
    $region6: #{generator_forward.1} parent=1 // pred_check
      _
    $region7: #{generator_forward.1} parent=1 // pred_check_branch
      %15 = sbr.rel (0) target = $region9
    $region8: #{generator_forward.1} parent=1 // pred_region
      %17 = vsyncadd [#allocation3], 0
      %s18 = sshll.u32 %s1, 4
      %s19 = int_to_ptr.hbm [resolvable:$true] %s18
      %s20 = sshll.u32 [#allocation2], 4
      %s21 = int_to_ptr.vmem [resolvable:$true] %s20
      %26 = dma.hbm_to_vmem [thread:$0]  %s19, 768, %s21, [#allocation3], 256, 256, 16
    $region9: #{generator_forward.1} parent=1 // pred_fallthru
      _
    // Predicated region
    $region10: #{generator_forward.1} parent=1 // pred_check
      _
    $region11: #{generator_forward.1} parent=1 // pred_check_branch
      %28 = sbr.rel (0) target = $region13
    $region12: #{generator_forward.1} parent=1 // pred_region
      %30 = vsyncadd [#allocation5], 0
      %s31 = sshll.u32 %s2, 4
      %s32 = int_to_ptr.hbm [resolvable:$true] %s31
      %s33 = sshll.u32 [#allocation4], 4
      %s34 = int_to_ptr.vmem [resolvable:$true] %s33
      %39 = dma.hbm_to_vmem [thread:$0]  %s32, 16384, %s34, [#allocation5], 256, 256, 16
    $region13: #{generator_forward.1} parent=1 // pred_fallthru
      _
    // Predicated region
    $region14: #{generator_forward.1} parent=1 // pred_check
      _
    $region15: #{generator_forward.1} parent=1 // pred_check_branch
      %41 = sbr.rel (0) target = $region17
    $region16: #{generator_forward.1} parent=1 // pred_region
      %43 = vsyncadd [#allocation5], 0
      %s44 = sshll.u32 %s3, 4
      %s45 = int_to_ptr.hbm [resolvable:$true] %s44
      %s46 = sshll.u32 [#allocation6], 4
      %s47 = int_to_ptr.vmem [resolvable:$true] %s46
      %52 = dma.hbm_to_vmem [thread:$0]  %s45, 4096, %s47, [#allocation5], 64, 64, 4
    $region17: #{generator_forward.1} parent=1 // pred_fallthru
      _
    // Predicated region
    $region18: #{generator_forward.1} parent=1 // pred_check
      _
    $region19: #{generator_forward.1} parent=1 // pred_check_branch
      %54 = sbr.rel (0) target = $region21
    $region20: #{generator_forward.1} parent=1 // pred_region
      _
    $region21: #{generator_forward.1} parent=1 // pred_fallthru
      _
    // Predicated region
    $region22: #{generator_forward.1} parent=1 // pred_check
      _
    $region23: #{generator_forward.1} parent=1 // pred_check_branch
      %56 = sbr.rel (0) target = $region25
    $region24: #{generator_forward.1} parent=1 // pred_region
      %58 = dma.done [#allocation3], 768
    $region25: #{generator_forward.1} parent=1 // pred_fallthru
      _
    // Predicated region
    $region26: #{generator_forward.1} parent=1 // pred_check
      _
    $region27: #{generator_forward.1} parent=1 // pred_check_branch
      %60 = sbr.rel (0) target = $region29
    $region28: #{generator_forward.1} parent=1 // pred_region
      %62 = dma.done [#allocation5], 16384
    $region29: #{generator_forward.1} parent=1 // pred_fallthru
      _
    // Predicated region
    $region30: #{generator_forward.1} parent=1 // pred_check
      _
    $region31: #{generator_forward.1} parent=1 // pred_check_branch
      %64 = sbr.rel (0) target = $region33
    $region32: #{generator_forward.1} parent=1 // pred_region
      %66 = dma.done [#allocation5], 4096
    $region33: #{generator_forward.1} parent=1 // pred_fallthru
      _
    %v68 = vld [vmem:[%s4] ss:$8 sm:$0xf]
    %s69 = scalar_lea.vmem %s4, 1
    %v70 = vld [vmem:[%s69] ss:$8 sm:$0xf]
    %s71 = scalar_lea.vmem %s4, 2
    %v72 = vld [vmem:[%s71] ss:$8 sm:$0xf]
    %s73 = scalar_lea.vmem %s4, 3
    %v74 = vld [vmem:[%s73] ss:$8 sm:$0xf]
    %v75 = vld [vmem:[%s4 + $0x4] ss:$0 sm:$0xff]
    %v76 = vld [vmem:[%s0] sm:$0xf]
    %v77 = vld [vmem:[#allocation2] sm:$0xff]
    %v78 = vld [vmem:[#allocation2 + $0x8] sm:$0xff]
    %v79 = vld [vmem:[#allocation2 + $0x10] sm:$0xff]
    %v80 = vld [vmem:[#allocation2 + $0x18] sm:$0xff]
    %v81 = vld [vmem:[#allocation2 + $0x20] sm:$0xff]
    %v82 = vld [vmem:[#allocation2 + $0x28] sm:$0xff]
    %v89 = vunpack.c.l.b16 %v77
    %v90 = vunpack.c.h.b16 %v77
    %v91 = vunpack.c.l.b16 %v78
    %v92 = vunpack.c.h.b16 %v78
    %v93 = vunpack.c.l.b16 %v79
    %v94 = vunpack.c.h.b16 %v79
    %v95 = vunpack.c.l.b16 %v80
    %v96 = vunpack.c.h.b16 %v80
    %v97 = vunpack.c.l.b16 %v81
    %v98 = vunpack.c.h.b16 %v81
    %v99 = vunpack.c.l.b16 %v82
    %v100 = vunpack.c.h.b16 %v82
    %v101 = vpack.c.b16 %v93, %v89
    %v102 = vpack.c.b16 %v94, %v90
    %v103 = vpack.c.b16 %v95, %v91
    %v104 = vpack.c.b16 %v96, %v92
    %v105 = vpack.c.b16 %v97, %v97
    %v106 = vpack.c.b16 %v98, %v98
    %v107 = vpack.c.b16 %v99, %v99
    %v108 = vpack.c.b16 %v100, %v100
    %vm113 = vcmask 195584
    %v115 = vsel %vm113, %v76, 0
    %vm117 = vcmask 1043456
    %v119 = vsel %vm117, %v105, 0
    %v122 = vsel %vm117, %v106, 0
    %v125 = vsel %vm117, %v107, 0
    %v128 = vsel %vm117, %v108, 0
    %130 = vmatpush.bf16.msra.mxu0 0
    %131 = vmatpush.bf16.msra.mxu0 0
    %132 = vmatpush.bf16.msra.mxu0 0
    %133 = vmatpush.bf16.msra.mxu0 0
    %134 = vmatpush.bf16.msra.mxu0 0
    %135 = vmatpush.bf16.msra.mxu0 0
    %136 = vmatpush.bf16.msra.mxu0 %v119
    %137 = vmatpush.bf16.msra.mxu0 %v101
    %138 = vmatmul.bf16.gmra.mxu0 %v115
    %v139 = vpop.f32.mrf.mxu0
    %v140 = vadd.f32 0.0, %v139
    %v141 = vpop.f32.mrf.mxu0
    %142 = vdwg.mxu0
    %143 = vmatpush.bf16.msra.mxu0 0
    %144 = vmatpush.bf16.msra.mxu0 0
    %145 = vmatpush.bf16.msra.mxu0 0
    %146 = vmatpush.bf16.msra.mxu0 0
    %147 = vmatpush.bf16.msra.mxu0 0
    %148 = vmatpush.bf16.msra.mxu0 0
    %149 = vmatpush.bf16.msra.mxu0 %v122
    %150 = vmatpush.bf16.msra.mxu0 %v102
    %151 = vmatmul.bf16.gmra.mxu0 %v115
    %v152 = vpop.f32.mrf.mxu0
    %v153 = vadd.f32 0.0, %v152
    %v154 = vpop.f32.mrf.mxu0
    %155 = vdwg.mxu0
    %156 = vmatpush.bf16.msra.mxu0 0
    %157 = vmatpush.bf16.msra.mxu0 0
    %158 = vmatpush.bf16.msra.mxu0 0
    %159 = vmatpush.bf16.msra.mxu0 0
    %160 = vmatpush.bf16.msra.mxu0 0
    %161 = vmatpush.bf16.msra.mxu0 0
    %162 = vmatpush.bf16.msra.mxu0 %v125
    %163 = vmatpush.bf16.msra.mxu0 %v103
    %164 = vmatmul.bf16.gmra.mxu0 %v115
    %v165 = vpop.f32.mrf.mxu0
    %v166 = vadd.f32 0.0, %v165
    %v167 = vpop.f32.mrf.mxu0
    %168 = vdwg.mxu0
    %169 = vmatpush.bf16.msra.mxu0 0
    %170 = vmatpush.bf16.msra.mxu0 0
    %171 = vmatpush.bf16.msra.mxu0 0
    %172 = vmatpush.bf16.msra.mxu0 0
    %173 = vmatpush.bf16.msra.mxu0 0
    %174 = vmatpush.bf16.msra.mxu0 0
    %175 = vmatpush.bf16.msra.mxu0 %v128
    %176 = vmatpush.bf16.msra.mxu0 %v104
    %177 = vmatmul.bf16.gmra.mxu0 %v115
    %v178 = vpop.f32.mrf.mxu0
    %v179 = vadd.f32 0.0, %v178
    %v180 = vpop.f32.mrf.mxu0
    %181 = vdwg.mxu0
    %v182 = vrot.slane %v140, 4
    %v183 = vadd.f32 %v140, %v182
    %v184 = vrot.slane %v183, 2
    %v185 = vadd.f32 %v183, %v184
    %v186 = vrot.slane %v185, 1
    %v187 = vadd.f32 %v185, %v186
    %v188 = vrot.slane %v153, 4
    %v189 = vadd.f32 %v153, %v188
    %v190 = vrot.slane %v189, 2
    %v191 = vadd.f32 %v189, %v190
    %v192 = vrot.slane %v191, 1
    %v193 = vadd.f32 %v191, %v192
    %v194 = vrot.slane %v166, 4
    %v195 = vadd.f32 %v166, %v194
    %v196 = vrot.slane %v195, 2
    %v197 = vadd.f32 %v195, %v196
    %v198 = vrot.slane %v197, 1
    %v199 = vadd.f32 %v197, %v198
    %v200 = vrot.slane %v179, 4
    %v201 = vadd.f32 %v179, %v200
    %v202 = vrot.slane %v201, 2
    %v203 = vadd.f32 %v201, %v202
    %v204 = vrot.slane %v203, 1
    %v205 = vadd.f32 %v203, %v204
    %v206 = vmul.f32 %v187, 0.125
    %v207 = vmul.f32 %v193, 0.125
    %v208 = vmul.f32 %v199, 0.125
    %v209 = vmul.f32 %v205, 0.125
    %v210 = vmul.f32 %v140, %v140
    %v211 = vmul.f32 %v153, %v153
    %v212 = vmul.f32 %v166, %v166
    %v213 = vmul.f32 %v179, %v179
    %v214 = vrot.slane %v210, 4
    %v215 = vadd.f32 %v210, %v214
    %v216 = vrot.slane %v215, 2
    %v217 = vadd.f32 %v215, %v216
    %v218 = vrot.slane %v217, 1
    %v219 = vadd.f32 %v217, %v218
    %v220 = vrot.slane %v211, 4
    %v221 = vadd.f32 %v211, %v220
    %v222 = vrot.slane %v221, 2
    %v223 = vadd.f32 %v221, %v222
    %v224 = vrot.slane %v223, 1
    %v225 = vadd.f32 %v223, %v224
    %v226 = vrot.slane %v212, 4
    %v227 = vadd.f32 %v212, %v226
    %v228 = vrot.slane %v227, 2
    %v229 = vadd.f32 %v227, %v228
    %v230 = vrot.slane %v229, 1
    %v231 = vadd.f32 %v229, %v230
    %v232 = vrot.slane %v213, 4
    %v233 = vadd.f32 %v213, %v232
    %v234 = vrot.slane %v233, 2
    %v235 = vadd.f32 %v233, %v234
    %v236 = vrot.slane %v235, 1
    %v237 = vadd.f32 %v235, %v236
    %v238 = vmul.f32 %v219, 0.125
    %v239 = vmul.f32 %v225, 0.125
    %v240 = vmul.f32 %v231, 0.125
    %v241 = vmul.f32 %v237, 0.125
    %v242 = vmul.f32 %v206, %v206
    %v243 = vmul.f32 %v207, %v207
    %v244 = vmul.f32 %v208, %v208
    %v245 = vmul.f32 %v209, %v209
    %v246 = vsub.f32 %v238, %v242
    %v247 = vsub.f32 %v239, %v243
    %v248 = vsub.f32 %v240, %v244
    %v249 = vsub.f32 %v241, %v245
    %v250 = vadd.f32 %v246, 1e-05
    %v251 = vadd.f32 %v247, 1e-05
    %v252 = vadd.f32 %v248, 1e-05
    %v253 = vadd.f32 %v249, 1e-05
    %v254 = vrsqrt.pop %v250
    %v255 = vmul.f32 %v254, %v250
    %v256 = vmul.f32 %v255, %v254
    %v257 = vmul.f32 0.5, %v256
    %v258 = vsub.f32 1.5, %v257
    %v259 = vmul.f32 %v254, %v258
    %vm260 = vweird.f32 %v250
    %vm261 = vweird.f32 %v254
    %vm262 = vmor %vm260, %vm261
    %v263 = vsel %vm262, %v254, %v259
    %v264 = vrsqrt.pop %v251
    %v265 = vmul.f32 %v264, %v251
    %v266 = vmul.f32 %v265, %v264
    %v267 = vmul.f32 0.5, %v266
    %v268 = vsub.f32 1.5, %v267
    %v269 = vmul.f32 %v264, %v268
    %vm270 = vweird.f32 %v251
    %vm271 = vweird.f32 %v264
    %vm272 = vmor %vm270, %vm271
    %v273 = vsel %vm272, %v264, %v269
    %v274 = vrsqrt.pop %v252
    %v275 = vmul.f32 %v274, %v252
    %v276 = vmul.f32 %v275, %v274
    %v277 = vmul.f32 0.5, %v276
    %v278 = vsub.f32 1.5, %v277
    %v279 = vmul.f32 %v274, %v278
    %vm280 = vweird.f32 %v252
    %vm281 = vweird.f32 %v274
    %vm282 = vmor %vm280, %vm281
    %v283 = vsel %vm282, %v274, %v279
    %v284 = vrsqrt.pop %v253
    %v285 = vmul.f32 %v284, %v253
    %v286 = vmul.f32 %v285, %v284
    %v287 = vmul.f32 0.5, %v286
    %v288 = vsub.f32 1.5, %v287
    %v289 = vmul.f32 %v284, %v288
    %vm290 = vweird.f32 %v253
    %vm291 = vweird.f32 %v284
    %vm292 = vmor %vm290, %vm291
    %v293 = vsel %vm292, %v284, %v289
    %v298 = vrot.slane %v273, 7
    %v299 = vrot.slane %v283, 6
    %v300 = vrot.slane %v293, 5
    %vm301 = vcmask 1040384
    %v302 = vsel %vm301, %v263, %v298
    %vm303 = vcmask 1042434
    %v304 = vsel %vm303, %v299, %v300
    %vm305 = vcmask 1041408
    %v306 = vsel %vm305, %v302, %v304
    %v308 = vmul.f32 %v68, %v306
    %v310 = vperm.slane %v308, 0
    %v311 = vperm.slane %v308, 1
    %v312 = vperm.slane %v308, 2
    %v313 = vperm.slane %v308, 3
    %v318 = vmul.f32 %v206, %v310
    %v319 = vmul.f32 %v207, %v311
    %v320 = vmul.f32 %v208, %v312
    %v321 = vmul.f32 %v209, %v313
    %v326 = vrot.slane %v319, 7
    %v327 = vrot.slane %v320, 6
    %v328 = vrot.slane %v321, 5
    %v329 = vsel %vm301, %v318, %v326
    %v330 = vsel %vm303, %v327, %v328
    %v331 = vsel %vm305, %v329, %v330
    %v333 = vsub.f32 %v70, %v331
    %v334 = vmul.f32 %v140, %v310
    %v335 = vmul.f32 %v153, %v311
    %v336 = vmul.f32 %v166, %v312
    %v337 = vmul.f32 %v179, %v313
    %v339 = vperm.slane %v333, 0
    %v340 = vperm.slane %v333, 1
    %v341 = vperm.slane %v333, 2
    %v342 = vperm.slane %v333, 3
    %v347 = vadd.f32 %v334, %v339
    %v348 = vadd.f32 %v335, %v340
    %v349 = vadd.f32 %v336, %v341
    %v350 = vadd.f32 %v337, %v342
    %v351 = vmax.f32 %v347, 0.0
    %v352 = vmax.f32 %v348, 0.0
    %v353 = vmax.f32 %v349, 0.0
    %v354 = vmax.f32 %v350, 0.0
    %v355 = vpack.c.bf16 %v351, %v351
    %v356 = vpack.c.bf16 %v352, %v352
    %v357 = vpack.c.bf16 %v353, %v353
    %v358 = vpack.c.bf16 %v354, %v354
    %v359 = vld [vmem:[#allocation4] sm:$0xff]
    %v360 = vld [vmem:[#allocation4 + $0x8] sm:$0xff]
    %v361 = vld [vmem:[#allocation4 + $0x10] sm:$0xff]
    %v362 = vld [vmem:[#allocation4 + $0x18] sm:$0xff]
    %v363 = vld [vmem:[#allocation4 + $0x20] sm:$0xff]
    %v364 = vld [vmem:[#allocation4 + $0x28] sm:$0xff]
    %v365 = vld [vmem:[#allocation4 + $0x30] sm:$0xff]
    %v366 = vld [vmem:[#allocation4 + $0x38] sm:$0xff]
    %v367 = vld [vmem:[#allocation4 + $0x40] sm:$0xff]
    %v368 = vld [vmem:[#allocation4 + $0x48] sm:$0xff]
    %v369 = vld [vmem:[#allocation4 + $0x50] sm:$0xff]
    %v370 = vld [vmem:[#allocation4 + $0x58] sm:$0xff]
    %v371 = vld [vmem:[#allocation4 + $0x60] sm:$0xff]
    %v372 = vld [vmem:[#allocation4 + $0x68] sm:$0xff]
    %v373 = vld [vmem:[#allocation4 + $0x70] sm:$0xff]
    %v374 = vld [vmem:[#allocation4 + $0x78] sm:$0xff]
    %v375 = vld [vmem:[#allocation4 + $0x80] sm:$0xff]
    %v376 = vld [vmem:[#allocation4 + $0x88] sm:$0xff]
    %v377 = vld [vmem:[#allocation4 + $0x90] sm:$0xff]
    %v378 = vld [vmem:[#allocation4 + $0x98] sm:$0xff]
    %v379 = vld [vmem:[#allocation4 + $0xa0] sm:$0xff]
    %v380 = vld [vmem:[#allocation4 + $0xa8] sm:$0xff]
    %v381 = vld [vmem:[#allocation4 + $0xb0] sm:$0xff]
    %v382 = vld [vmem:[#allocation4 + $0xb8] sm:$0xff]
    %v383 = vld [vmem:[#allocation4 + $0xc0] sm:$0xff]
    %v384 = vld [vmem:[#allocation4 + $0xc8] sm:$0xff]
    %v385 = vld [vmem:[#allocation4 + $0xd0] sm:$0xff]
    %v386 = vld [vmem:[#allocation4 + $0xd8] sm:$0xff]
    %v387 = vld [vmem:[#allocation4 + $0xe0] sm:$0xff]
    %v388 = vld [vmem:[#allocation4 + $0xe8] sm:$0xff]
    %v389 = vld [vmem:[#allocation4 + $0xf0] sm:$0xff]
    %v390 = vld [vmem:[#allocation4 + $0xf8] sm:$0xff]
    %v391 = vld [vmem:[#allocation4 + $0x100] sm:$0xff]
    %v392 = vld [vmem:[#allocation4 + $0x108] sm:$0xff]
    %v393 = vld [vmem:[#allocation4 + $0x110] sm:$0xff]
    %v394 = vld [vmem:[#allocation4 + $0x118] sm:$0xff]
    %v395 = vld [vmem:[#allocation4 + $0x120] sm:$0xff]
    %v396 = vld [vmem:[#allocation4 + $0x128] sm:$0xff]
    %v397 = vld [vmem:[#allocation4 + $0x130] sm:$0xff]
    %v398 = vld [vmem:[#allocation4 + $0x138] sm:$0xff]
    %v399 = vld [vmem:[#allocation4 + $0x140] sm:$0xff]
    %v400 = vld [vmem:[#allocation4 + $0x148] sm:$0xff]
    %v401 = vld [vmem:[#allocation4 + $0x150] sm:$0xff]
    %v402 = vld [vmem:[#allocation4 + $0x158] sm:$0xff]
    %v403 = vld [vmem:[#allocation4 + $0x160] sm:$0xff]
    %v404 = vld [vmem:[#allocation4 + $0x168] sm:$0xff]
    %v405 = vld [vmem:[#allocation4 + $0x170] sm:$0xff]
    %v406 = vld [vmem:[#allocation4 + $0x178] sm:$0xff]
    %v407 = vld [vmem:[#allocation4 + $0x180] sm:$0xff]
    %v408 = vld [vmem:[#allocation4 + $0x188] sm:$0xff]
    %v409 = vld [vmem:[#allocation4 + $0x190] sm:$0xff]
    %v410 = vld [vmem:[#allocation4 + $0x198] sm:$0xff]
    %v411 = vld [vmem:[#allocation4 + $0x1a0] sm:$0xff]
    %v412 = vld [vmem:[#allocation4 + $0x1a8] sm:$0xff]
    %v413 = vld [vmem:[#allocation4 + $0x1b0] sm:$0xff]
    %v414 = vld [vmem:[#allocation4 + $0x1b8] sm:$0xff]
    %v415 = vld [vmem:[#allocation4 + $0x1c0] sm:$0xff]
    %v416 = vld [vmem:[#allocation4 + $0x1c8] sm:$0xff]
    %v417 = vld [vmem:[#allocation4 + $0x1d0] sm:$0xff]
    %v418 = vld [vmem:[#allocation4 + $0x1d8] sm:$0xff]
    %v419 = vld [vmem:[#allocation4 + $0x1e0] sm:$0xff]
    %v420 = vld [vmem:[#allocation4 + $0x1e8] sm:$0xff]
    %v421 = vld [vmem:[#allocation4 + $0x1f0] sm:$0xff]
    %v422 = vld [vmem:[#allocation4 + $0x1f8] sm:$0xff]
    %v423 = vld [vmem:[#allocation4 + $0x200] sm:$0xff]
    %v424 = vld [vmem:[#allocation4 + $0x208] sm:$0xff]
    %v425 = vld [vmem:[#allocation4 + $0x210] sm:$0xff]
    %v426 = vld [vmem:[#allocation4 + $0x218] sm:$0xff]
    %v427 = vld [vmem:[#allocation4 + $0x220] sm:$0xff]
    %v428 = vld [vmem:[#allocation4 + $0x228] sm:$0xff]
    %v429 = vld [vmem:[#allocation4 + $0x230] sm:$0xff]
    %v430 = vld [vmem:[#allocation4 + $0x238] sm:$0xff]
    %v431 = vld [vmem:[#allocation4 + $0x240] sm:$0xff]
    %v432 = vld [vmem:[#allocation4 + $0x248] sm:$0xff]
    %v433 = vld [vmem:[#allocation4 + $0x250] sm:$0xff]
    %v434 = vld [vmem:[#allocation4 + $0x258] sm:$0xff]
    %v435 = vld [vmem:[#allocation4 + $0x260] sm:$0xff]
    %v436 = vld [vmem:[#allocation4 + $0x268] sm:$0xff]
    %v437 = vld [vmem:[#allocation4 + $0x270] sm:$0xff]
    %v438 = vld [vmem:[#allocation4 + $0x278] sm:$0xff]
    %v439 = vld [vmem:[#allocation4 + $0x280] sm:$0xff]
    %v440 = vld [vmem:[#allocation4 + $0x288] sm:$0xff]
    %v441 = vld [vmem:[#allocation4 + $0x290] sm:$0xff]
    %v442 = vld [vmem:[#allocation4 + $0x298] sm:$0xff]
    %v443 = vld [vmem:[#allocation4 + $0x2a0] sm:$0xff]
    %v444 = vld [vmem:[#allocation4 + $0x2a8] sm:$0xff]
    %v445 = vld [vmem:[#allocation4 + $0x2b0] sm:$0xff]
    %v446 = vld [vmem:[#allocation4 + $0x2b8] sm:$0xff]
    %v447 = vld [vmem:[#allocation4 + $0x2c0] sm:$0xff]
    %v448 = vld [vmem:[#allocation4 + $0x2c8] sm:$0xff]
    %v449 = vld [vmem:[#allocation4 + $0x2d0] sm:$0xff]
    %v450 = vld [vmem:[#allocation4 + $0x2d8] sm:$0xff]
    %v451 = vld [vmem:[#allocation4 + $0x2e0] sm:$0xff]
    %v452 = vld [vmem:[#allocation4 + $0x2e8] sm:$0xff]
    %v453 = vld [vmem:[#allocation4 + $0x2f0] sm:$0xff]
    %v454 = vld [vmem:[#allocation4 + $0x2f8] sm:$0xff]
    %v455 = vld [vmem:[#allocation4 + $0x300] sm:$0xff]
    %v456 = vld [vmem:[#allocation4 + $0x308] sm:$0xff]
    %v457 = vld [vmem:[#allocation4 + $0x310] sm:$0xff]
    %v458 = vld [vmem:[#allocation4 + $0x318] sm:$0xff]
    %v459 = vld [vmem:[#allocation4 + $0x320] sm:$0xff]
    %v460 = vld [vmem:[#allocation4 + $0x328] sm:$0xff]
    %v461 = vld [vmem:[#allocation4 + $0x330] sm:$0xff]
    %v462 = vld [vmem:[#allocation4 + $0x338] sm:$0xff]
    %v463 = vld [vmem:[#allocation4 + $0x340] sm:$0xff]
    %v464 = vld [vmem:[#allocation4 + $0x348] sm:$0xff]
    %v465 = vld [vmem:[#allocation4 + $0x350] sm:$0xff]
    %v466 = vld [vmem:[#allocation4 + $0x358] sm:$0xff]
    %v467 = vld [vmem:[#allocation4 + $0x360] sm:$0xff]
    %v468 = vld [vmem:[#allocation4 + $0x368] sm:$0xff]
    %v469 = vld [vmem:[#allocation4 + $0x370] sm:$0xff]
    %v470 = vld [vmem:[#allocation4 + $0x378] sm:$0xff]
    %v471 = vld [vmem:[#allocation4 + $0x380] sm:$0xff]
    %v472 = vld [vmem:[#allocation4 + $0x388] sm:$0xff]
    %v473 = vld [vmem:[#allocation4 + $0x390] sm:$0xff]
    %v474 = vld [vmem:[#allocation4 + $0x398] sm:$0xff]
    %v475 = vld [vmem:[#allocation4 + $0x3a0] sm:$0xff]
    %v476 = vld [vmem:[#allocation4 + $0x3a8] sm:$0xff]
    %v477 = vld [vmem:[#allocation4 + $0x3b0] sm:$0xff]
    %v478 = vld [vmem:[#allocation4 + $0x3b8] sm:$0xff]
    %v479 = vld [vmem:[#allocation4 + $0x3c0] sm:$0xff]
    %v480 = vld [vmem:[#allocation4 + $0x3c8] sm:$0xff]
    %v481 = vld [vmem:[#allocation4 + $0x3d0] sm:$0xff]
    %v482 = vld [vmem:[#allocation4 + $0x3d8] sm:$0xff]
    %v483 = vld [vmem:[#allocation4 + $0x3e0] sm:$0xff]
    %v484 = vld [vmem:[#allocation4 + $0x3e8] sm:$0xff]
    %v485 = vld [vmem:[#allocation4 + $0x3f0] sm:$0xff]
    %v486 = vld [vmem:[#allocation4 + $0x3f8] sm:$0xff]
    %v615 = vunpack.c.l.b16 %v359
    %v616 = vunpack.c.h.b16 %v359
    %v617 = vunpack.c.l.b16 %v360
    %v618 = vunpack.c.h.b16 %v360
    %v619 = vunpack.c.l.b16 %v361
    %v620 = vunpack.c.h.b16 %v361
    %v621 = vunpack.c.l.b16 %v362
    %v622 = vunpack.c.h.b16 %v362
    %v623 = vunpack.c.l.b16 %v363
    %v624 = vunpack.c.h.b16 %v363
    %v625 = vunpack.c.l.b16 %v364
    %v626 = vunpack.c.h.b16 %v364
    %v627 = vunpack.c.l.b16 %v365
    %v628 = vunpack.c.h.b16 %v365
    %v629 = vunpack.c.l.b16 %v366
    %v630 = vunpack.c.h.b16 %v366
    %v631 = vunpack.c.l.b16 %v367
    %v632 = vunpack.c.h.b16 %v367
    %v633 = vunpack.c.l.b16 %v368
    %v634 = vunpack.c.h.b16 %v368
    %v635 = vunpack.c.l.b16 %v369
    %v636 = vunpack.c.h.b16 %v369
    %v637 = vunpack.c.l.b16 %v370
    %v638 = vunpack.c.h.b16 %v370
    %v639 = vunpack.c.l.b16 %v371
    %v640 = vunpack.c.h.b16 %v371
    %v641 = vunpack.c.l.b16 %v372
    %v642 = vunpack.c.h.b16 %v372
    %v643 = vunpack.c.l.b16 %v373
    %v644 = vunpack.c.h.b16 %v373
    %v645 = vunpack.c.l.b16 %v374
    %v646 = vunpack.c.h.b16 %v374
    %v647 = vunpack.c.l.b16 %v375
    %v648 = vunpack.c.h.b16 %v375
    %v649 = vunpack.c.l.b16 %v376
    %v650 = vunpack.c.h.b16 %v376
    %v651 = vunpack.c.l.b16 %v377
    %v652 = vunpack.c.h.b16 %v377
    %v653 = vunpack.c.l.b16 %v378
    %v654 = vunpack.c.h.b16 %v378
    %v655 = vunpack.c.l.b16 %v379
    %v656 = vunpack.c.h.b16 %v379
    %v657 = vunpack.c.l.b16 %v380
    %v658 = vunpack.c.h.b16 %v380
    %v659 = vunpack.c.l.b16 %v381
    %v660 = vunpack.c.h.b16 %v381
    %v661 = vunpack.c.l.b16 %v382
    %v662 = vunpack.c.h.b16 %v382
    %v663 = vunpack.c.l.b16 %v383
    %v664 = vunpack.c.h.b16 %v383
    %v665 = vunpack.c.l.b16 %v384
    %v666 = vunpack.c.h.b16 %v384
    %v667 = vunpack.c.l.b16 %v385
    %v668 = vunpack.c.h.b16 %v385
    %v669 = vunpack.c.l.b16 %v386
    %v670 = vunpack.c.h.b16 %v386
    %v671 = vunpack.c.l.b16 %v387
    %v672 = vunpack.c.h.b16 %v387
    %v673 = vunpack.c.l.b16 %v388
    %v674 = vunpack.c.h.b16 %v388
    %v675 = vunpack.c.l.b16 %v389
    %v676 = vunpack.c.h.b16 %v389
    %v677 = vunpack.c.l.b16 %v390
    %v678 = vunpack.c.h.b16 %v390
    %v679 = vunpack.c.l.b16 %v391
    %v680 = vunpack.c.h.b16 %v391
    %v681 = vunpack.c.l.b16 %v392
    %v682 = vunpack.c.h.b16 %v392
    %v683 = vunpack.c.l.b16 %v393
    %v684 = vunpack.c.h.b16 %v393
    %v685 = vunpack.c.l.b16 %v394
    %v686 = vunpack.c.h.b16 %v394
    %v687 = vunpack.c.l.b16 %v395
    %v688 = vunpack.c.h.b16 %v395
    %v689 = vunpack.c.l.b16 %v396
    %v690 = vunpack.c.h.b16 %v396
    %v691 = vunpack.c.l.b16 %v397
    %v692 = vunpack.c.h.b16 %v397
    %v693 = vunpack.c.l.b16 %v398
    %v694 = vunpack.c.h.b16 %v398
    %v695 = vunpack.c.l.b16 %v399
    %v696 = vunpack.c.h.b16 %v399
    %v697 = vunpack.c.l.b16 %v400
    %v698 = vunpack.c.h.b16 %v400
    %v699 = vunpack.c.l.b16 %v401
    %v700 = vunpack.c.h.b16 %v401
    %v701 = vunpack.c.l.b16 %v402
    %v702 = vunpack.c.h.b16 %v402
    %v703 = vunpack.c.l.b16 %v403
    %v704 = vunpack.c.h.b16 %v403
    %v705 = vunpack.c.l.b16 %v404
    %v706 = vunpack.c.h.b16 %v404
    %v707 = vunpack.c.l.b16 %v405
    %v708 = vunpack.c.h.b16 %v405
    %v709 = vunpack.c.l.b16 %v406
    %v710 = vunpack.c.h.b16 %v406
    %v711 = vunpack.c.l.b16 %v407
    %v712 = vunpack.c.h.b16 %v407
    %v713 = vunpack.c.l.b16 %v408
    %v714 = vunpack.c.h.b16 %v408
    %v715 = vunpack.c.l.b16 %v409
    %v716 = vunpack.c.h.b16 %v409
    %v717 = vunpack.c.l.b16 %v410
    %v718 = vunpack.c.h.b16 %v410
    %v719 = vunpack.c.l.b16 %v411
    %v720 = vunpack.c.h.b16 %v411
    %v721 = vunpack.c.l.b16 %v412
    %v722 = vunpack.c.h.b16 %v412
    %v723 = vunpack.c.l.b16 %v413
    %v724 = vunpack.c.h.b16 %v413
    %v725 = vunpack.c.l.b16 %v414
    %v726 = vunpack.c.h.b16 %v414
    %v727 = vunpack.c.l.b16 %v415
    %v728 = vunpack.c.h.b16 %v415
    %v729 = vunpack.c.l.b16 %v416
    %v730 = vunpack.c.h.b16 %v416
    %v731 = vunpack.c.l.b16 %v417
    %v732 = vunpack.c.h.b16 %v417
    %v733 = vunpack.c.l.b16 %v418
    %v734 = vunpack.c.h.b16 %v418
    %v735 = vunpack.c.l.b16 %v419
    %v736 = vunpack.c.h.b16 %v419
    %v737 = vunpack.c.l.b16 %v420
    %v738 = vunpack.c.h.b16 %v420
    %v739 = vunpack.c.l.b16 %v421
    %v740 = vunpack.c.h.b16 %v421
    %v741 = vunpack.c.l.b16 %v422
    %v742 = vunpack.c.h.b16 %v422
    %v743 = vunpack.c.l.b16 %v423
    %v744 = vunpack.c.h.b16 %v423
    %v745 = vunpack.c.l.b16 %v424
    %v746 = vunpack.c.h.b16 %v424
    %v747 = vunpack.c.l.b16 %v425
    %v748 = vunpack.c.h.b16 %v425
    %v749 = vunpack.c.l.b16 %v426
    %v750 = vunpack.c.h.b16 %v426
    %v751 = vunpack.c.l.b16 %v427
    %v752 = vunpack.c.h.b16 %v427
    %v753 = vunpack.c.l.b16 %v428
    %v754 = vunpack.c.h.b16 %v428
    %v755 = vunpack.c.l.b16 %v429
    %v756 = vunpack.c.h.b16 %v429
    %v757 = vunpack.c.l.b16 %v430
    %v758 = vunpack.c.h.b16 %v430
    %v759 = vunpack.c.l.b16 %v431
    %v760 = vunpack.c.h.b16 %v431
    %v761 = vunpack.c.l.b16 %v432
    %v762 = vunpack.c.h.b16 %v432
    %v763 = vunpack.c.l.b16 %v433
    %v764 = vunpack.c.h.b16 %v433
    %v765 = vunpack.c.l.b16 %v434
    %v766 = vunpack.c.h.b16 %v434
    %v767 = vunpack.c.l.b16 %v435
    %v768 = vunpack.c.h.b16 %v435
    %v769 = vunpack.c.l.b16 %v436
    %v770 = vunpack.c.h.b16 %v436
    %v771 = vunpack.c.l.b16 %v437
    %v772 = vunpack.c.h.b16 %v437
    %v773 = vunpack.c.l.b16 %v438
    %v774 = vunpack.c.h.b16 %v438
    %v775 = vunpack.c.l.b16 %v439
    %v776 = vunpack.c.h.b16 %v439
    %v777 = vunpack.c.l.b16 %v440
    %v778 = vunpack.c.h.b16 %v440
    %v779 = vunpack.c.l.b16 %v441
    %v780 = vunpack.c.h.b16 %v441
    %v781 = vunpack.c.l.b16 %v442
    %v782 = vunpack.c.h.b16 %v442
    %v783 = vunpack.c.l.b16 %v443
    %v784 = vunpack.c.h.b16 %v443
    %v785 = vunpack.c.l.b16 %v444
    %v786 = vunpack.c.h.b16 %v444
    %v787 = vunpack.c.l.b16 %v445
    %v788 = vunpack.c.h.b16 %v445
    %v789 = vunpack.c.l.b16 %v446
    %v790 = vunpack.c.h.b16 %v446
    %v791 = vunpack.c.l.b16 %v447
    %v792 = vunpack.c.h.b16 %v447
    %v793 = vunpack.c.l.b16 %v448
    %v794 = vunpack.c.h.b16 %v448
    %v795 = vunpack.c.l.b16 %v449
    %v796 = vunpack.c.h.b16 %v449
    %v797 = vunpack.c.l.b16 %v450
    %v798 = vunpack.c.h.b16 %v450
    %v799 = vunpack.c.l.b16 %v451
    %v800 = vunpack.c.h.b16 %v451
    %v801 = vunpack.c.l.b16 %v452
    %v802 = vunpack.c.h.b16 %v452
    %v803 = vunpack.c.l.b16 %v453
    %v804 = vunpack.c.h.b16 %v453
    %v805 = vunpack.c.l.b16 %v454
    %v806 = vunpack.c.h.b16 %v454
    %v807 = vunpack.c.l.b16 %v455
    %v808 = vunpack.c.h.b16 %v455
    %v809 = vunpack.c.l.b16 %v456
    %v810 = vunpack.c.h.b16 %v456
    %v811 = vunpack.c.l.b16 %v457
    %v812 = vunpack.c.h.b16 %v457
    %v813 = vunpack.c.l.b16 %v458
    %v814 = vunpack.c.h.b16 %v458
    %v815 = vunpack.c.l.b16 %v459
    %v816 = vunpack.c.h.b16 %v459
    %v817 = vunpack.c.l.b16 %v460
    %v818 = vunpack.c.h.b16 %v460
    %v819 = vunpack.c.l.b16 %v461
    %v820 = vunpack.c.h.b16 %v461
    %v821 = vunpack.c.l.b16 %v462
    %v822 = vunpack.c.h.b16 %v462
    %v823 = vunpack.c.l.b16 %v463
    %v824 = vunpack.c.h.b16 %v463
    %v825 = vunpack.c.l.b16 %v464
    %v826 = vunpack.c.h.b16 %v464
    %v827 = vunpack.c.l.b16 %v465
    %v828 = vunpack.c.h.b16 %v465
    %v829 = vunpack.c.l.b16 %v466
    %v830 = vunpack.c.h.b16 %v466
    %v831 = vunpack.c.l.b16 %v467
    %v832 = vunpack.c.h.b16 %v467
    %v833 = vunpack.c.l.b16 %v468
    %v834 = vunpack.c.h.b16 %v468
    %v835 = vunpack.c.l.b16 %v469
    %v836 = vunpack.c.h.b16 %v469
    %v837 = vunpack.c.l.b16 %v470
    %v838 = vunpack.c.h.b16 %v470
    %v839 = vunpack.c.l.b16 %v471
    %v840 = vunpack.c.h.b16 %v471
    %v841 = vunpack.c.l.b16 %v472
    %v842 = vunpack.c.h.b16 %v472
    %v843 = vunpack.c.l.b16 %v473
    %v844 = vunpack.c.h.b16 %v473
    %v845 = vunpack.c.l.b16 %v474
    %v846 = vunpack.c.h.b16 %v474
    %v847 = vunpack.c.l.b16 %v475
    %v848 = vunpack.c.h.b16 %v475
    %v849 = vunpack.c.l.b16 %v476
    %v850 = vunpack.c.h.b16 %v476
    %v851 = vunpack.c.l.b16 %v477
    %v852 = vunpack.c.h.b16 %v477
    %v853 = vunpack.c.l.b16 %v478
    %v854 = vunpack.c.h.b16 %v478
    %v855 = vunpack.c.l.b16 %v479
    %v856 = vunpack.c.h.b16 %v479
    %v857 = vunpack.c.l.b16 %v480
    %v858 = vunpack.c.h.b16 %v480
    %v859 = vunpack.c.l.b16 %v481
    %v860 = vunpack.c.h.b16 %v481
    %v861 = vunpack.c.l.b16 %v482
    %v862 = vunpack.c.h.b16 %v482
    %v863 = vunpack.c.l.b16 %v483
    %v864 = vunpack.c.h.b16 %v483
    %v865 = vunpack.c.l.b16 %v484
    %v866 = vunpack.c.h.b16 %v484
    %v867 = vunpack.c.l.b16 %v485
    %v868 = vunpack.c.h.b16 %v485
    %v869 = vunpack.c.l.b16 %v486
    %v870 = vunpack.c.h.b16 %v486
    %v871 = vpack.c.b16 %v619, %v615
    %v872 = vpack.c.b16 %v620, %v616
    %v873 = vpack.c.b16 %v621, %v617
    %v874 = vpack.c.b16 %v622, %v618
    %v875 = vpack.c.b16 %v627, %v623
    %v876 = vpack.c.b16 %v628, %v624
    %v877 = vpack.c.b16 %v629, %v625
    %v878 = vpack.c.b16 %v630, %v626
    %v879 = vpack.c.b16 %v635, %v631
    %v880 = vpack.c.b16 %v636, %v632
    %v881 = vpack.c.b16 %v637, %v633
    %v882 = vpack.c.b16 %v638, %v634
    %v883 = vpack.c.b16 %v643, %v639
    %v884 = vpack.c.b16 %v644, %v640
    %v885 = vpack.c.b16 %v645, %v641
    %v886 = vpack.c.b16 %v646, %v642
    %v887 = vpack.c.b16 %v651, %v647
    %v888 = vpack.c.b16 %v652, %v648
    %v889 = vpack.c.b16 %v653, %v649
    %v890 = vpack.c.b16 %v654, %v650
    %v891 = vpack.c.b16 %v659, %v655
    %v892 = vpack.c.b16 %v660, %v656
    %v893 = vpack.c.b16 %v661, %v657
    %v894 = vpack.c.b16 %v662, %v658
    %v895 = vpack.c.b16 %v667, %v663
    %v896 = vpack.c.b16 %v668, %v664
    %v897 = vpack.c.b16 %v669, %v665
    %v898 = vpack.c.b16 %v670, %v666
    %v899 = vpack.c.b16 %v675, %v671
    %v900 = vpack.c.b16 %v676, %v672
    %v901 = vpack.c.b16 %v677, %v673
    %v902 = vpack.c.b16 %v678, %v674
    %v903 = vpack.c.b16 %v683, %v679
    %v904 = vpack.c.b16 %v684, %v680
    %v905 = vpack.c.b16 %v685, %v681
    %v906 = vpack.c.b16 %v686, %v682
    %v907 = vpack.c.b16 %v691, %v687
    %v908 = vpack.c.b16 %v692, %v688
    %v909 = vpack.c.b16 %v693, %v689
    %v910 = vpack.c.b16 %v694, %v690
    %v911 = vpack.c.b16 %v699, %v695
    %v912 = vpack.c.b16 %v700, %v696
    %v913 = vpack.c.b16 %v701, %v697
    %v914 = vpack.c.b16 %v702, %v698
    %v915 = vpack.c.b16 %v707, %v703
    %v916 = vpack.c.b16 %v708, %v704
    %v917 = vpack.c.b16 %v709, %v705
    %v918 = vpack.c.b16 %v710, %v706
    %v919 = vpack.c.b16 %v715, %v711
    %v920 = vpack.c.b16 %v716, %v712
    %v921 = vpack.c.b16 %v717, %v713
    %v922 = vpack.c.b16 %v718, %v714
    %v923 = vpack.c.b16 %v723, %v719
    %v924 = vpack.c.b16 %v724, %v720
    %v925 = vpack.c.b16 %v725, %v721
    %v926 = vpack.c.b16 %v726, %v722
    %v927 = vpack.c.b16 %v731, %v727
    %v928 = vpack.c.b16 %v732, %v728
    %v929 = vpack.c.b16 %v733, %v729
    %v930 = vpack.c.b16 %v734, %v730
    %v931 = vpack.c.b16 %v739, %v735
    %v932 = vpack.c.b16 %v740, %v736
    %v933 = vpack.c.b16 %v741, %v737
    %v934 = vpack.c.b16 %v742, %v738
    %v935 = vpack.c.b16 %v747, %v743
    %v936 = vpack.c.b16 %v748, %v744
    %v937 = vpack.c.b16 %v749, %v745
    %v938 = vpack.c.b16 %v750, %v746
    %v939 = vpack.c.b16 %v755, %v751
    %v940 = vpack.c.b16 %v756, %v752
    %v941 = vpack.c.b16 %v757, %v753
    %v942 = vpack.c.b16 %v758, %v754
    %v943 = vpack.c.b16 %v763, %v759
    %v944 = vpack.c.b16 %v764, %v760
    %v945 = vpack.c.b16 %v765, %v761
    %v946 = vpack.c.b16 %v766, %v762
    %v947 = vpack.c.b16 %v771, %v767
    %v948 = vpack.c.b16 %v772, %v768
    %v949 = vpack.c.b16 %v773, %v769
    %v950 = vpack.c.b16 %v774, %v770
    %v951 = vpack.c.b16 %v779, %v775
    %v952 = vpack.c.b16 %v780, %v776
    %v953 = vpack.c.b16 %v781, %v777
    %v954 = vpack.c.b16 %v782, %v778
    %v955 = vpack.c.b16 %v787, %v783
    %v956 = vpack.c.b16 %v788, %v784
    %v957 = vpack.c.b16 %v789, %v785
    %v958 = vpack.c.b16 %v790, %v786
    %v959 = vpack.c.b16 %v795, %v791
    %v960 = vpack.c.b16 %v796, %v792
    %v961 = vpack.c.b16 %v797, %v793
    %v962 = vpack.c.b16 %v798, %v794
    %v963 = vpack.c.b16 %v803, %v799
    %v964 = vpack.c.b16 %v804, %v800
    %v965 = vpack.c.b16 %v805, %v801
    %v966 = vpack.c.b16 %v806, %v802
    %v967 = vpack.c.b16 %v811, %v807
    %v968 = vpack.c.b16 %v812, %v808
    %v969 = vpack.c.b16 %v813, %v809
    %v970 = vpack.c.b16 %v814, %v810
    %v971 = vpack.c.b16 %v819, %v815
    %v972 = vpack.c.b16 %v820, %v816
    %v973 = vpack.c.b16 %v821, %v817
    %v974 = vpack.c.b16 %v822, %v818
    %v975 = vpack.c.b16 %v827, %v823
    %v976 = vpack.c.b16 %v828, %v824
    %v977 = vpack.c.b16 %v829, %v825
    %v978 = vpack.c.b16 %v830, %v826
    %v979 = vpack.c.b16 %v835, %v831
    %v980 = vpack.c.b16 %v836, %v832
    %v981 = vpack.c.b16 %v837, %v833
    %v982 = vpack.c.b16 %v838, %v834
    %v983 = vpack.c.b16 %v843, %v839
    %v984 = vpack.c.b16 %v844, %v840
    %v985 = vpack.c.b16 %v845, %v841
    %v986 = vpack.c.b16 %v846, %v842
    %v987 = vpack.c.b16 %v851, %v847
    %v988 = vpack.c.b16 %v852, %v848
    %v989 = vpack.c.b16 %v853, %v849
    %v990 = vpack.c.b16 %v854, %v850
    %v991 = vpack.c.b16 %v859, %v855
    %v992 = vpack.c.b16 %v860, %v856
    %v993 = vpack.c.b16 %v861, %v857
    %v994 = vpack.c.b16 %v862, %v858
    %v995 = vpack.c.b16 %v867, %v863
    %v996 = vpack.c.b16 %v868, %v864
    %v997 = vpack.c.b16 %v869, %v865
    %v998 = vpack.c.b16 %v870, %v866
    %1127 = vmatpush.bf16.msra.mxu0 %v899
    %1128 = vmatpush.bf16.msra.mxu0 %v895
    %1129 = vmatpush.bf16.msra.mxu0 %v891
    %1130 = vmatpush.bf16.msra.mxu0 %v887
    %1131 = vmatpush.bf16.msra.mxu0 %v883
    %1132 = vmatpush.bf16.msra.mxu0 %v879
    %1133 = vmatpush.bf16.msra.mxu0 %v875
    %1134 = vmatpush.bf16.msra.mxu0 %v871
    %1135 = vmatmul.bf16.gmra.mxu0 %v355
    %v1136 = vpop.f32.mrf.mxu0
    %v1137 = vadd.f32 0.0, %v1136
    %v1138 = vpop.f32.mrf.mxu0
    %1139 = vdwg.mxu0
    %1140 = vmatpush.bf16.msra.mxu0 %v931
    %1141 = vmatpush.bf16.msra.mxu0 %v927
    %1142 = vmatpush.bf16.msra.mxu0 %v923
    %1143 = vmatpush.bf16.msra.mxu0 %v919
    %1144 = vmatpush.bf16.msra.mxu0 %v915
    %1145 = vmatpush.bf16.msra.mxu0 %v911
    %1146 = vmatpush.bf16.msra.mxu0 %v907
    %1147 = vmatpush.bf16.msra.mxu0 %v903
    %1148 = vmatmul.bf16.gmra.mxu0 %v356
    %v1149 = vpop.f32.mrf.mxu0
    %v1150 = vadd.f32 %v1137, %v1149
    %v1151 = vpop.f32.mrf.mxu0
    %1152 = vdwg.mxu0
    %1153 = vmatpush.bf16.msra.mxu0 %v963
    %1154 = vmatpush.bf16.msra.mxu0 %v959
    %1155 = vmatpush.bf16.msra.mxu0 %v955
    %1156 = vmatpush.bf16.msra.mxu0 %v951
    %1157 = vmatpush.bf16.msra.mxu0 %v947
    %1158 = vmatpush.bf16.msra.mxu0 %v943
    %1159 = vmatpush.bf16.msra.mxu0 %v939
    %1160 = vmatpush.bf16.msra.mxu0 %v935
    %1161 = vmatmul.bf16.gmra.mxu0 %v357
    %v1162 = vpop.f32.mrf.mxu0
    %v1163 = vadd.f32 %v1150, %v1162
    %v1164 = vpop.f32.mrf.mxu0
    %1165 = vdwg.mxu0
    %1166 = vmatpush.bf16.msra.mxu0 %v995
    %1167 = vmatpush.bf16.msra.mxu0 %v991
    %1168 = vmatpush.bf16.msra.mxu0 %v987
    %1169 = vmatpush.bf16.msra.mxu0 %v983
    %1170 = vmatpush.bf16.msra.mxu0 %v979
    %1171 = vmatpush.bf16.msra.mxu0 %v975
    %1172 = vmatpush.bf16.msra.mxu0 %v971
    %1173 = vmatpush.bf16.msra.mxu0 %v967
    %1174 = vmatmul.bf16.gmra.mxu0 %v358
    %v1175 = vpop.f32.mrf.mxu0
    %v1176 = vadd.f32 %v1163, %v1175
    %v1177 = vpop.f32.mrf.mxu0
    %1178 = vdwg.mxu0
    %1179 = vmatpush.bf16.msra.mxu0 %v900
    %1180 = vmatpush.bf16.msra.mxu0 %v896
    %1181 = vmatpush.bf16.msra.mxu0 %v892
    %1182 = vmatpush.bf16.msra.mxu0 %v888
    %1183 = vmatpush.bf16.msra.mxu0 %v884
    %1184 = vmatpush.bf16.msra.mxu0 %v880
    %1185 = vmatpush.bf16.msra.mxu0 %v876
    %1186 = vmatpush.bf16.msra.mxu0 %v872
    %1187 = vmatmul.bf16.gmra.mxu0 %v355
    %v1188 = vpop.f32.mrf.mxu0
    %v1189 = vadd.f32 0.0, %v1188
    %v1190 = vpop.f32.mrf.mxu0
    %1191 = vdwg.mxu0
    %1192 = vmatpush.bf16.msra.mxu0 %v932
    %1193 = vmatpush.bf16.msra.mxu0 %v928
    %1194 = vmatpush.bf16.msra.mxu0 %v924
    %1195 = vmatpush.bf16.msra.mxu0 %v920
    %1196 = vmatpush.bf16.msra.mxu0 %v916
    %1197 = vmatpush.bf16.msra.mxu0 %v912
    %1198 = vmatpush.bf16.msra.mxu0 %v908
    %1199 = vmatpush.bf16.msra.mxu0 %v904
    %1200 = vmatmul.bf16.gmra.mxu0 %v356
    %v1201 = vpop.f32.mrf.mxu0
    %v1202 = vadd.f32 %v1189, %v1201
    %v1203 = vpop.f32.mrf.mxu0
    %1204 = vdwg.mxu0
    %1205 = vmatpush.bf16.msra.mxu0 %v964
    %1206 = vmatpush.bf16.msra.mxu0 %v960
    %1207 = vmatpush.bf16.msra.mxu0 %v956
    %1208 = vmatpush.bf16.msra.mxu0 %v952
    %1209 = vmatpush.bf16.msra.mxu0 %v948
    %1210 = vmatpush.bf16.msra.mxu0 %v944
    %1211 = vmatpush.bf16.msra.mxu0 %v940
    %1212 = vmatpush.bf16.msra.mxu0 %v936
    %1213 = vmatmul.bf16.gmra.mxu0 %v357
    %v1214 = vpop.f32.mrf.mxu0
    %v1215 = vadd.f32 %v1202, %v1214
    %v1216 = vpop.f32.mrf.mxu0
    %1217 = vdwg.mxu0
    %1218 = vmatpush.bf16.msra.mxu0 %v996
    %1219 = vmatpush.bf16.msra.mxu0 %v992
    %1220 = vmatpush.bf16.msra.mxu0 %v988
    %1221 = vmatpush.bf16.msra.mxu0 %v984
    %1222 = vmatpush.bf16.msra.mxu0 %v980
    %1223 = vmatpush.bf16.msra.mxu0 %v976
    %1224 = vmatpush.bf16.msra.mxu0 %v972
    %1225 = vmatpush.bf16.msra.mxu0 %v968
    %1226 = vmatmul.bf16.gmra.mxu0 %v358
    %v1227 = vpop.f32.mrf.mxu0
    %v1228 = vadd.f32 %v1215, %v1227
    %v1229 = vpop.f32.mrf.mxu0
    %1230 = vdwg.mxu0
    %1231 = vmatpush.bf16.msra.mxu0 %v901
    %1232 = vmatpush.bf16.msra.mxu0 %v897
    %1233 = vmatpush.bf16.msra.mxu0 %v893
    %1234 = vmatpush.bf16.msra.mxu0 %v889
    %1235 = vmatpush.bf16.msra.mxu0 %v885
    %1236 = vmatpush.bf16.msra.mxu0 %v881
    %1237 = vmatpush.bf16.msra.mxu0 %v877
    %1238 = vmatpush.bf16.msra.mxu0 %v873
    %1239 = vmatmul.bf16.gmra.mxu0 %v355
    %v1240 = vpop.f32.mrf.mxu0
    %v1241 = vadd.f32 0.0, %v1240
    %v1242 = vpop.f32.mrf.mxu0
    %1243 = vdwg.mxu0
    %1244 = vmatpush.bf16.msra.mxu0 %v933
    %1245 = vmatpush.bf16.msra.mxu0 %v929
    %1246 = vmatpush.bf16.msra.mxu0 %v925
    %1247 = vmatpush.bf16.msra.mxu0 %v921
    %1248 = vmatpush.bf16.msra.mxu0 %v917
    %1249 = vmatpush.bf16.msra.mxu0 %v913
    %1250 = vmatpush.bf16.msra.mxu0 %v909
    %1251 = vmatpush.bf16.msra.mxu0 %v905
    %1252 = vmatmul.bf16.gmra.mxu0 %v356
    %v1253 = vpop.f32.mrf.mxu0
    %v1254 = vadd.f32 %v1241, %v1253
    %v1255 = vpop.f32.mrf.mxu0
    %1256 = vdwg.mxu0
    %1257 = vmatpush.bf16.msra.mxu0 %v965
    %1258 = vmatpush.bf16.msra.mxu0 %v961
    %1259 = vmatpush.bf16.msra.mxu0 %v957
    %1260 = vmatpush.bf16.msra.mxu0 %v953
    %1261 = vmatpush.bf16.msra.mxu0 %v949
    %1262 = vmatpush.bf16.msra.mxu0 %v945
    %1263 = vmatpush.bf16.msra.mxu0 %v941
    %1264 = vmatpush.bf16.msra.mxu0 %v937
    %1265 = vmatmul.bf16.gmra.mxu0 %v357
    %v1266 = vpop.f32.mrf.mxu0
    %v1267 = vadd.f32 %v1254, %v1266
    %v1268 = vpop.f32.mrf.mxu0
    %1269 = vdwg.mxu0
    %1270 = vmatpush.bf16.msra.mxu0 %v997
    %1271 = vmatpush.bf16.msra.mxu0 %v993
    %1272 = vmatpush.bf16.msra.mxu0 %v989
    %1273 = vmatpush.bf16.msra.mxu0 %v985
    %1274 = vmatpush.bf16.msra.mxu0 %v981
    %1275 = vmatpush.bf16.msra.mxu0 %v977
    %1276 = vmatpush.bf16.msra.mxu0 %v973
    %1277 = vmatpush.bf16.msra.mxu0 %v969
    %1278 = vmatmul.bf16.gmra.mxu0 %v358
    %v1279 = vpop.f32.mrf.mxu0
    %v1280 = vadd.f32 %v1267, %v1279
    %v1281 = vpop.f32.mrf.mxu0
    %1282 = vdwg.mxu0
    %1283 = vmatpush.bf16.msra.mxu0 %v902
    %1284 = vmatpush.bf16.msra.mxu0 %v898
    %1285 = vmatpush.bf16.msra.mxu0 %v894
    %1286 = vmatpush.bf16.msra.mxu0 %v890
    %1287 = vmatpush.bf16.msra.mxu0 %v886
    %1288 = vmatpush.bf16.msra.mxu0 %v882
    %1289 = vmatpush.bf16.msra.mxu0 %v878
    %1290 = vmatpush.bf16.msra.mxu0 %v874
    %1291 = vmatmul.bf16.gmra.mxu0 %v355
    %v1292 = vpop.f32.mrf.mxu0
    %v1293 = vadd.f32 0.0, %v1292
    %v1294 = vpop.f32.mrf.mxu0
    %1295 = vdwg.mxu0
    %1296 = vmatpush.bf16.msra.mxu0 %v934
    %1297 = vmatpush.bf16.msra.mxu0 %v930
    %1298 = vmatpush.bf16.msra.mxu0 %v926
    %1299 = vmatpush.bf16.msra.mxu0 %v922
    %1300 = vmatpush.bf16.msra.mxu0 %v918
    %1301 = vmatpush.bf16.msra.mxu0 %v914
    %1302 = vmatpush.bf16.msra.mxu0 %v910
    %1303 = vmatpush.bf16.msra.mxu0 %v906
    %1304 = vmatmul.bf16.gmra.mxu0 %v356
    %v1305 = vpop.f32.mrf.mxu0
    %v1306 = vadd.f32 %v1293, %v1305
    %v1307 = vpop.f32.mrf.mxu0
    %1308 = vdwg.mxu0
    %1309 = vmatpush.bf16.msra.mxu0 %v966
    %1310 = vmatpush.bf16.msra.mxu0 %v962
    %1311 = vmatpush.bf16.msra.mxu0 %v958
    %1312 = vmatpush.bf16.msra.mxu0 %v954
    %1313 = vmatpush.bf16.msra.mxu0 %v950
    %1314 = vmatpush.bf16.msra.mxu0 %v946
    %1315 = vmatpush.bf16.msra.mxu0 %v942
    %1316 = vmatpush.bf16.msra.mxu0 %v938
    %1317 = vmatmul.bf16.gmra.mxu0 %v357
    %v1318 = vpop.f32.mrf.mxu0
    %v1319 = vadd.f32 %v1306, %v1318
    %v1320 = vpop.f32.mrf.mxu0
    %1321 = vdwg.mxu0
    %1322 = vmatpush.bf16.msra.mxu0 %v998
    %1323 = vmatpush.bf16.msra.mxu0 %v994
    %1324 = vmatpush.bf16.msra.mxu0 %v990
    %1325 = vmatpush.bf16.msra.mxu0 %v986
    %1326 = vmatpush.bf16.msra.mxu0 %v982
    %1327 = vmatpush.bf16.msra.mxu0 %v978
    %1328 = vmatpush.bf16.msra.mxu0 %v974
    %1329 = vmatpush.bf16.msra.mxu0 %v970
    %1330 = vmatmul.bf16.gmra.mxu0 %v358
    %v1331 = vpop.f32.mrf.mxu0
    %v1332 = vadd.f32 %v1319, %v1331
    %v1333 = vpop.f32.mrf.mxu0
    %1334 = vdwg.mxu0
    %v1335 = vrot.slane %v1176, 4
    %v1336 = vadd.f32 %v1176, %v1335
    %v1337 = vrot.slane %v1336, 2
    %v1338 = vadd.f32 %v1336, %v1337
    %v1339 = vrot.slane %v1338, 1
    %v1340 = vadd.f32 %v1338, %v1339
    %v1341 = vrot.slane %v1228, 4
    %v1342 = vadd.f32 %v1228, %v1341
    %v1343 = vrot.slane %v1342, 2
    %v1344 = vadd.f32 %v1342, %v1343
    %v1345 = vrot.slane %v1344, 1
    %v1346 = vadd.f32 %v1344, %v1345
    %v1347 = vrot.slane %v1280, 4
    %v1348 = vadd.f32 %v1280, %v1347
    %v1349 = vrot.slane %v1348, 2
    %v1350 = vadd.f32 %v1348, %v1349
    %v1351 = vrot.slane %v1350, 1
    %v1352 = vadd.f32 %v1350, %v1351
    %v1353 = vrot.slane %v1332, 4
    %v1354 = vadd.f32 %v1332, %v1353
    %v1355 = vrot.slane %v1354, 2
    %v1356 = vadd.f32 %v1354, %v1355
    %v1357 = vrot.slane %v1356, 1
    %v1358 = vadd.f32 %v1356, %v1357
    %v1359 = vmul.f32 %v1340, 0.125
    %v1360 = vmul.f32 %v1346, 0.125
    %v1361 = vmul.f32 %v1352, 0.125
    %v1362 = vmul.f32 %v1358, 0.125
    %v1363 = vmul.f32 %v1176, %v1176
    %v1364 = vmul.f32 %v1228, %v1228
    %v1365 = vmul.f32 %v1280, %v1280
    %v1366 = vmul.f32 %v1332, %v1332
    %v1367 = vrot.slane %v1363, 4
    %v1368 = vadd.f32 %v1363, %v1367
    %v1369 = vrot.slane %v1368, 2
    %v1370 = vadd.f32 %v1368, %v1369
    %v1371 = vrot.slane %v1370, 1
    %v1372 = vadd.f32 %v1370, %v1371
    %v1373 = vrot.slane %v1364, 4
    %v1374 = vadd.f32 %v1364, %v1373
    %v1375 = vrot.slane %v1374, 2
    %v1376 = vadd.f32 %v1374, %v1375
    %v1377 = vrot.slane %v1376, 1
    %v1378 = vadd.f32 %v1376, %v1377
    %v1379 = vrot.slane %v1365, 4
    %v1380 = vadd.f32 %v1365, %v1379
    %v1381 = vrot.slane %v1380, 2
    %v1382 = vadd.f32 %v1380, %v1381
    %v1383 = vrot.slane %v1382, 1
    %v1384 = vadd.f32 %v1382, %v1383
    %v1385 = vrot.slane %v1366, 4
    %v1386 = vadd.f32 %v1366, %v1385
    %v1387 = vrot.slane %v1386, 2
    %v1388 = vadd.f32 %v1386, %v1387
    %v1389 = vrot.slane %v1388, 1
    %v1390 = vadd.f32 %v1388, %v1389
    %v1391 = vmul.f32 %v1372, 0.125
    %v1392 = vmul.f32 %v1378, 0.125
    %v1393 = vmul.f32 %v1384, 0.125
    %v1394 = vmul.f32 %v1390, 0.125
    %v1395 = vmul.f32 %v1359, %v1359
    %v1396 = vmul.f32 %v1360, %v1360
    %v1397 = vmul.f32 %v1361, %v1361
    %v1398 = vmul.f32 %v1362, %v1362
    %v1399 = vsub.f32 %v1391, %v1395
    %v1400 = vsub.f32 %v1392, %v1396
    %v1401 = vsub.f32 %v1393, %v1397
    %v1402 = vsub.f32 %v1394, %v1398
    %v1403 = vadd.f32 %v1399, 1e-05
    %v1404 = vadd.f32 %v1400, 1e-05
    %v1405 = vadd.f32 %v1401, 1e-05
    %v1406 = vadd.f32 %v1402, 1e-05
    %v1407 = vrsqrt.pop %v1403
    %v1408 = vmul.f32 %v1407, %v1403
    %v1409 = vmul.f32 %v1408, %v1407
    %v1410 = vmul.f32 0.5, %v1409
    %v1411 = vsub.f32 1.5, %v1410
    %v1412 = vmul.f32 %v1407, %v1411
    %vm1413 = vweird.f32 %v1403
    %vm1414 = vweird.f32 %v1407
    %vm1415 = vmor %vm1413, %vm1414
    %v1416 = vsel %vm1415, %v1407, %v1412
    %v1417 = vrsqrt.pop %v1404
    %v1418 = vmul.f32 %v1417, %v1404
    %v1419 = vmul.f32 %v1418, %v1417
    %v1420 = vmul.f32 0.5, %v1419
    %v1421 = vsub.f32 1.5, %v1420
    %v1422 = vmul.f32 %v1417, %v1421
    %vm1423 = vweird.f32 %v1404
    %vm1424 = vweird.f32 %v1417
    %vm1425 = vmor %vm1423, %vm1424
    %v1426 = vsel %vm1425, %v1417, %v1422
    %v1427 = vrsqrt.pop %v1405
    %v1428 = vmul.f32 %v1427, %v1405
    %v1429 = vmul.f32 %v1428, %v1427
    %v1430 = vmul.f32 0.5, %v1429
    %v1431 = vsub.f32 1.5, %v1430
    %v1432 = vmul.f32 %v1427, %v1431
    %vm1433 = vweird.f32 %v1405
    %vm1434 = vweird.f32 %v1427
    %vm1435 = vmor %vm1433, %vm1434
    %v1436 = vsel %vm1435, %v1427, %v1432
    %v1437 = vrsqrt.pop %v1406
    %v1438 = vmul.f32 %v1437, %v1406
    %v1439 = vmul.f32 %v1438, %v1437
    %v1440 = vmul.f32 0.5, %v1439
    %v1441 = vsub.f32 1.5, %v1440
    %v1442 = vmul.f32 %v1437, %v1441
    %vm1443 = vweird.f32 %v1406
    %vm1444 = vweird.f32 %v1437
    %vm1445 = vmor %vm1443, %vm1444
    %v1446 = vsel %vm1445, %v1437, %v1442
    %v1451 = vrot.slane %v1426, 7
    %v1452 = vrot.slane %v1436, 6
    %v1453 = vrot.slane %v1446, 5
    %v1454 = vsel %vm301, %v1416, %v1451
    %v1455 = vsel %vm303, %v1452, %v1453
    %v1456 = vsel %vm305, %v1454, %v1455
    %v1458 = vmul.f32 %v72, %v1456
    %v1460 = vperm.slane %v1458, 0
    %v1461 = vperm.slane %v1458, 1
    %v1462 = vperm.slane %v1458, 2
    %v1463 = vperm.slane %v1458, 3
    %v1468 = vmul.f32 %v1359, %v1460
    %v1469 = vmul.f32 %v1360, %v1461
    %v1470 = vmul.f32 %v1361, %v1462
    %v1471 = vmul.f32 %v1362, %v1463
    %v1476 = vrot.slane %v1469, 7
    %v1477 = vrot.slane %v1470, 6
    %v1478 = vrot.slane %v1471, 5
    %v1479 = vsel %vm301, %v1468, %v1476
    %v1480 = vsel %vm303, %v1477, %v1478
    %v1481 = vsel %vm305, %v1479, %v1480
    %v1483 = vsub.f32 %v74, %v1481
    %v1484 = vmul.f32 %v1176, %v1460
    %v1485 = vmul.f32 %v1228, %v1461
    %v1486 = vmul.f32 %v1280, %v1462
    %v1487 = vmul.f32 %v1332, %v1463
    %v1489 = vperm.slane %v1483, 0
    %v1490 = vperm.slane %v1483, 1
    %v1491 = vperm.slane %v1483, 2
    %v1492 = vperm.slane %v1483, 3
    %v1497 = vadd.f32 %v1484, %v1489
    %v1498 = vadd.f32 %v1485, %v1490
    %v1499 = vadd.f32 %v1486, %v1491
    %v1500 = vadd.f32 %v1487, %v1492
    %v1501 = vmax.f32 %v1497, 0.0
    %v1502 = vmax.f32 %v1498, 0.0
    %v1503 = vmax.f32 %v1499, 0.0
    %v1504 = vmax.f32 %v1500, 0.0
    %v1505 = vpack.c.bf16 %v1501, %v1501
    %v1506 = vpack.c.bf16 %v1502, %v1502
    %v1507 = vpack.c.bf16 %v1503, %v1503
    %v1508 = vpack.c.bf16 %v1504, %v1504
    %v1509 = vld [vmem:[#allocation6] sm:$0xf]
    %v1510 = vld [vmem:[#allocation6 + $0x4] sm:$0xf]
    %v1511 = vld [vmem:[#allocation6 + $0x8] sm:$0xf]
    %v1512 = vld [vmem:[#allocation6 + $0xc] sm:$0xf]
    %v1513 = vld [vmem:[#allocation6 + $0x10] sm:$0xf]
    %v1514 = vld [vmem:[#allocation6 + $0x14] sm:$0xf]
    %v1515 = vld [vmem:[#allocation6 + $0x18] sm:$0xf]
    %v1516 = vld [vmem:[#allocation6 + $0x1c] sm:$0xf]
    %v1517 = vld [vmem:[#allocation6 + $0x20] sm:$0xf]
    %v1518 = vld [vmem:[#allocation6 + $0x24] sm:$0xf]
    %v1519 = vld [vmem:[#allocation6 + $0x28] sm:$0xf]
    %v1520 = vld [vmem:[#allocation6 + $0x2c] sm:$0xf]
    %v1521 = vld [vmem:[#allocation6 + $0x30] sm:$0xf]
    %v1522 = vld [vmem:[#allocation6 + $0x34] sm:$0xf]
    %v1523 = vld [vmem:[#allocation6 + $0x38] sm:$0xf]
    %v1524 = vld [vmem:[#allocation6 + $0x3c] sm:$0xf]
    %v1525 = vld [vmem:[#allocation6 + $0x40] sm:$0xf]
    %v1526 = vld [vmem:[#allocation6 + $0x44] sm:$0xf]
    %v1527 = vld [vmem:[#allocation6 + $0x48] sm:$0xf]
    %v1528 = vld [vmem:[#allocation6 + $0x4c] sm:$0xf]
    %v1529 = vld [vmem:[#allocation6 + $0x50] sm:$0xf]
    %v1530 = vld [vmem:[#allocation6 + $0x54] sm:$0xf]
    %v1531 = vld [vmem:[#allocation6 + $0x58] sm:$0xf]
    %v1532 = vld [vmem:[#allocation6 + $0x5c] sm:$0xf]
    %v1533 = vld [vmem:[#allocation6 + $0x60] sm:$0xf]
    %v1534 = vld [vmem:[#allocation6 + $0x64] sm:$0xf]
    %v1535 = vld [vmem:[#allocation6 + $0x68] sm:$0xf]
    %v1536 = vld [vmem:[#allocation6 + $0x6c] sm:$0xf]
    %v1537 = vld [vmem:[#allocation6 + $0x70] sm:$0xf]
    %v1538 = vld [vmem:[#allocation6 + $0x74] sm:$0xf]
    %v1539 = vld [vmem:[#allocation6 + $0x78] sm:$0xf]
    %v1540 = vld [vmem:[#allocation6 + $0x7c] sm:$0xf]
    %v1541 = vld [vmem:[#allocation6 + $0x80] sm:$0xf]
    %v1542 = vld [vmem:[#allocation6 + $0x84] sm:$0xf]
    %v1543 = vld [vmem:[#allocation6 + $0x88] sm:$0xf]
    %v1544 = vld [vmem:[#allocation6 + $0x8c] sm:$0xf]
    %v1545 = vld [vmem:[#allocation6 + $0x90] sm:$0xf]
    %v1546 = vld [vmem:[#allocation6 + $0x94] sm:$0xf]
    %v1547 = vld [vmem:[#allocation6 + $0x98] sm:$0xf]
    %v1548 = vld [vmem:[#allocation6 + $0x9c] sm:$0xf]
    %v1549 = vld [vmem:[#allocation6 + $0xa0] sm:$0xf]
    %v1550 = vld [vmem:[#allocation6 + $0xa4] sm:$0xf]
    %v1551 = vld [vmem:[#allocation6 + $0xa8] sm:$0xf]
    %v1552 = vld [vmem:[#allocation6 + $0xac] sm:$0xf]
    %v1553 = vld [vmem:[#allocation6 + $0xb0] sm:$0xf]
    %v1554 = vld [vmem:[#allocation6 + $0xb4] sm:$0xf]
    %v1555 = vld [vmem:[#allocation6 + $0xb8] sm:$0xf]
    %v1556 = vld [vmem:[#allocation6 + $0xbc] sm:$0xf]
    %v1557 = vld [vmem:[#allocation6 + $0xc0] sm:$0xf]
    %v1558 = vld [vmem:[#allocation6 + $0xc4] sm:$0xf]
    %v1559 = vld [vmem:[#allocation6 + $0xc8] sm:$0xf]
    %v1560 = vld [vmem:[#allocation6 + $0xcc] sm:$0xf]
    %v1561 = vld [vmem:[#allocation6 + $0xd0] sm:$0xf]
    %v1562 = vld [vmem:[#allocation6 + $0xd4] sm:$0xf]
    %v1563 = vld [vmem:[#allocation6 + $0xd8] sm:$0xf]
    %v1564 = vld [vmem:[#allocation6 + $0xdc] sm:$0xf]
    %v1565 = vld [vmem:[#allocation6 + $0xe0] sm:$0xf]
    %v1566 = vld [vmem:[#allocation6 + $0xe4] sm:$0xf]
    %v1567 = vld [vmem:[#allocation6 + $0xe8] sm:$0xf]
    %v1568 = vld [vmem:[#allocation6 + $0xec] sm:$0xf]
    %v1569 = vld [vmem:[#allocation6 + $0xf0] sm:$0xf]
    %v1570 = vld [vmem:[#allocation6 + $0xf4] sm:$0xf]
    %v1571 = vld [vmem:[#allocation6 + $0xf8] sm:$0xf]
    %v1572 = vld [vmem:[#allocation6 + $0xfc] sm:$0xf]
    %v1637 = vunpack.c.l.b16 %v1509
    %v1638 = vunpack.c.l.b16 %v1510
    %v1639 = vunpack.c.l.b16 %v1511
    %v1640 = vunpack.c.l.b16 %v1512
    %v1641 = vunpack.c.l.b16 %v1513
    %v1642 = vunpack.c.l.b16 %v1514
    %v1643 = vunpack.c.l.b16 %v1515
    %v1644 = vunpack.c.l.b16 %v1516
    %v1645 = vunpack.c.l.b16 %v1517
    %v1646 = vunpack.c.l.b16 %v1518
    %v1647 = vunpack.c.l.b16 %v1519
    %v1648 = vunpack.c.l.b16 %v1520
    %v1649 = vunpack.c.l.b16 %v1521
    %v1650 = vunpack.c.l.b16 %v1522
    %v1651 = vunpack.c.l.b16 %v1523
    %v1652 = vunpack.c.l.b16 %v1524
    %v1653 = vunpack.c.l.b16 %v1525
    %v1654 = vunpack.c.l.b16 %v1526
    %v1655 = vunpack.c.l.b16 %v1527
    %v1656 = vunpack.c.l.b16 %v1528
    %v1657 = vunpack.c.l.b16 %v1529
    %v1658 = vunpack.c.l.b16 %v1530
    %v1659 = vunpack.c.l.b16 %v1531
    %v1660 = vunpack.c.l.b16 %v1532
    %v1661 = vunpack.c.l.b16 %v1533
    %v1662 = vunpack.c.l.b16 %v1534
    %v1663 = vunpack.c.l.b16 %v1535
    %v1664 = vunpack.c.l.b16 %v1536
    %v1665 = vunpack.c.l.b16 %v1537
    %v1666 = vunpack.c.l.b16 %v1538
    %v1667 = vunpack.c.l.b16 %v1539
    %v1668 = vunpack.c.l.b16 %v1540
    %v1669 = vunpack.c.l.b16 %v1541
    %v1670 = vunpack.c.l.b16 %v1542
    %v1671 = vunpack.c.l.b16 %v1543
    %v1672 = vunpack.c.l.b16 %v1544
    %v1673 = vunpack.c.l.b16 %v1545
    %v1674 = vunpack.c.l.b16 %v1546
    %v1675 = vunpack.c.l.b16 %v1547
    %v1676 = vunpack.c.l.b16 %v1548
    %v1677 = vunpack.c.l.b16 %v1549
    %v1678 = vunpack.c.l.b16 %v1550
    %v1679 = vunpack.c.l.b16 %v1551
    %v1680 = vunpack.c.l.b16 %v1552
    %v1681 = vunpack.c.l.b16 %v1553
    %v1682 = vunpack.c.l.b16 %v1554
    %v1683 = vunpack.c.l.b16 %v1555
    %v1684 = vunpack.c.l.b16 %v1556
    %v1685 = vunpack.c.l.b16 %v1557
    %v1686 = vunpack.c.l.b16 %v1558
    %v1687 = vunpack.c.l.b16 %v1559
    %v1688 = vunpack.c.l.b16 %v1560
    %v1689 = vunpack.c.l.b16 %v1561
    %v1690 = vunpack.c.l.b16 %v1562
    %v1691 = vunpack.c.l.b16 %v1563
    %v1692 = vunpack.c.l.b16 %v1564
    %v1693 = vunpack.c.l.b16 %v1565
    %v1694 = vunpack.c.l.b16 %v1566
    %v1695 = vunpack.c.l.b16 %v1567
    %v1696 = vunpack.c.l.b16 %v1568
    %v1697 = vunpack.c.l.b16 %v1569
    %v1698 = vunpack.c.l.b16 %v1570
    %v1699 = vunpack.c.l.b16 %v1571
    %v1700 = vunpack.c.l.b16 %v1572
    %v1701 = vpack.c.b16 %v1638, %v1637
    %v1702 = vpack.c.b16 %v1640, %v1639
    %v1703 = vpack.c.b16 %v1642, %v1641
    %v1704 = vpack.c.b16 %v1644, %v1643
    %v1705 = vpack.c.b16 %v1646, %v1645
    %v1706 = vpack.c.b16 %v1648, %v1647
    %v1707 = vpack.c.b16 %v1650, %v1649
    %v1708 = vpack.c.b16 %v1652, %v1651
    %v1709 = vpack.c.b16 %v1654, %v1653
    %v1710 = vpack.c.b16 %v1656, %v1655
    %v1711 = vpack.c.b16 %v1658, %v1657
    %v1712 = vpack.c.b16 %v1660, %v1659
    %v1713 = vpack.c.b16 %v1662, %v1661
    %v1714 = vpack.c.b16 %v1664, %v1663
    %v1715 = vpack.c.b16 %v1666, %v1665
    %v1716 = vpack.c.b16 %v1668, %v1667
    %v1717 = vpack.c.b16 %v1670, %v1669
    %v1718 = vpack.c.b16 %v1672, %v1671
    %v1719 = vpack.c.b16 %v1674, %v1673
    %v1720 = vpack.c.b16 %v1676, %v1675
    %v1721 = vpack.c.b16 %v1678, %v1677
    %v1722 = vpack.c.b16 %v1680, %v1679
    %v1723 = vpack.c.b16 %v1682, %v1681
    %v1724 = vpack.c.b16 %v1684, %v1683
    %v1725 = vpack.c.b16 %v1686, %v1685
    %v1726 = vpack.c.b16 %v1688, %v1687
    %v1727 = vpack.c.b16 %v1690, %v1689
    %v1728 = vpack.c.b16 %v1692, %v1691
    %v1729 = vpack.c.b16 %v1694, %v1693
    %v1730 = vpack.c.b16 %v1696, %v1695
    %v1731 = vpack.c.b16 %v1698, %v1697
    %v1732 = vpack.c.b16 %v1700, %v1699
    %1765 = vmatpush.bf16.msra.mxu0 %v1708
    %1766 = vmatpush.bf16.msra.mxu0 %v1707
    %1767 = vmatpush.bf16.msra.mxu0 %v1706
    %1768 = vmatpush.bf16.msra.mxu0 %v1705
    %1769 = vmatpush.bf16.msra.mxu0 %v1704
    %1770 = vmatpush.bf16.msra.mxu0 %v1703
    %1771 = vmatpush.bf16.msra.mxu0 %v1702
    %1772 = vmatpush.bf16.msra.mxu0 %v1701
    %1773 = vmatmul.bf16.gmra.mxu0 %v1505
    %v1774 = vpop.f32.mrf.mxu0
    %v1775 = vadd.f32 %v75, %v1774
    %v1776 = vpop.f32.mrf.mxu0
    %1777 = vdwg.mxu0
    %1778 = vmatpush.bf16.msra.mxu0 %v1716
    %1779 = vmatpush.bf16.msra.mxu0 %v1715
    %1780 = vmatpush.bf16.msra.mxu0 %v1714
    %1781 = vmatpush.bf16.msra.mxu0 %v1713
    %1782 = vmatpush.bf16.msra.mxu0 %v1712
    %1783 = vmatpush.bf16.msra.mxu0 %v1711
    %1784 = vmatpush.bf16.msra.mxu0 %v1710
    %1785 = vmatpush.bf16.msra.mxu0 %v1709
    %1786 = vmatmul.bf16.gmra.mxu0 %v1506
    %v1787 = vpop.f32.mrf.mxu0
    %v1788 = vadd.f32 %v1775, %v1787
    %v1789 = vpop.f32.mrf.mxu0
    %1790 = vdwg.mxu0
    %1791 = vmatpush.bf16.msra.mxu0 %v1724
    %1792 = vmatpush.bf16.msra.mxu0 %v1723
    %1793 = vmatpush.bf16.msra.mxu0 %v1722
    %1794 = vmatpush.bf16.msra.mxu0 %v1721
    %1795 = vmatpush.bf16.msra.mxu0 %v1720
    %1796 = vmatpush.bf16.msra.mxu0 %v1719
    %1797 = vmatpush.bf16.msra.mxu0 %v1718
    %1798 = vmatpush.bf16.msra.mxu0 %v1717
    %1799 = vmatmul.bf16.gmra.mxu0 %v1507
    %v1800 = vpop.f32.mrf.mxu0
    %v1801 = vadd.f32 %v1788, %v1800
    %v1802 = vpop.f32.mrf.mxu0
    %1803 = vdwg.mxu0
    %1804 = vmatpush.bf16.msra.mxu0 %v1732
    %1805 = vmatpush.bf16.msra.mxu0 %v1731
    %1806 = vmatpush.bf16.msra.mxu0 %v1730
    %1807 = vmatpush.bf16.msra.mxu0 %v1729
    %1808 = vmatpush.bf16.msra.mxu0 %v1728
    %1809 = vmatpush.bf16.msra.mxu0 %v1727
    %1810 = vmatpush.bf16.msra.mxu0 %v1726
    %1811 = vmatpush.bf16.msra.mxu0 %v1725
    %1812 = vmatmul.bf16.gmra.mxu0 %v1508
    %v1813 = vpop.f32.mrf.mxu0
    %v1814 = vadd.f32 %v1801, %v1813
    %v1815 = vpop.f32.mrf.mxu0
    %1816 = vdwg.mxu0
    %1817 = vst [vmem:[%s5] sm:$0xff] %v1814
    // Predicated region
    $region34: #{generator_forward.1} parent=1 // pred_check
      _
    $region35: #{generator_forward.1} parent=1 // pred_check_branch
      %1819 = sbr.rel (0) target = $region37
    $region36: #{generator_forward.1} parent=1 // pred_region
      _
    $region37: #{generator_forward.1} parent=1 // pred_fallthru
      _
    // Predicated region
    $region38: #{generator_forward.1} parent=1 // pred_check
      _
    $region39: #{generator_forward.1} parent=1 // pred_check_branch
      %1821 = sbr.rel (0) target = $region41
    $region40: #{generator_forward.1} parent=1 // pred_region
      _
    $region41: #{generator_forward.1} parent=1 // pred_fallthru
      _
    %1822 = vsyncpa [#allocation3], 1
    %1823 = vsyncpa [#allocation5], 1

</llo_original>
